<compile_context>
chip_gen: v7x
topology: tpu7x:2x2x1
jax: 0.10.0
libtpu: 0.0.40
codegen_flags: <defaults>
</compile_context>

<pallas_src>
import functools

import jax
import jax.numpy as jnp
from jax import lax
from jax.experimental import pallas as pl
from jax.experimental.pallas import tpu as pltpu

_LANE = 128       # rays per sublane row (lane dimension)
_SUBLANE = 8
_CHUNK = 8        # sublane rows per inner-loop step (1 f32 vreg per plane)


def _round_up(a, b):
    return ((a + b - 1) // b) * b


def _recip(x):
    """EUP approximate reciprocal + one Newton-Raphson refinement step.

    The EUP part runs in a free slot; the single Newton step (~3 VALU ops) is
    kept for accuracy of the perspective divide (could be dropped on v6e if
    downstream sphere tracing tolerates ~1e-3 relative error).
    """
    r = pl.reciprocal(x, approx=True)
    return r * (2.0 - x * r)


def _ray_kernel(table_ref, ndc_ref, vid_ref, out_ref):
    """Per-tile ray construction, sublane-dense layout, sub-tiled body.

    table_ref : SMEM (V*16,)      per-view inverse MVP, row-major flattened
    ndc_ref   : VMEM (2, TS, 128) planes = ndc_x, ndc_y
    vid_ref   : VMEM (TS, 128)    int32 view id per ray
    out_ref   : VMEM (8, TS, 128) planes = [ox, oy, oz, dx, dy, dz, t_min, t_max]
    """
    nviews = table_ref.shape[0] // 16
    ts = out_ref.shape[1]
    n_chunks = ts // _CHUNK

    def chunk(r0):
        rows = pl.ds(r0, _CHUNK)

        x = ndc_ref[0, rows, :]           # (8, 128)
        y = ndc_ref[1, rows, :]
        vids = vid_ref[rows, :]

        # Masked-select gather of per-ray matrix coefficients from the tiny
        # SMEM table. Cheap for small V; for large V (>~8-16 depending on
        # chip) prefer a pre-gathered [16, rows, 128] input or an MXU one-hot
        # gather instead.
        masks = [vids == v for v in range(1, nviews)]

        def coeff(f):
            val = jnp.full(x.shape, table_ref[f], dtype=x.dtype)
            for v in range(1, nviews):
                val = jnp.where(masks[v - 1], table_ref[16 * v + f], val)
            return val

        # Gather fused with consumption: per matrix row i, build a/b/c/d and
        # immediately reduce them to the near/far clip-point coordinates
        # (z = -1 for near, +1 for far; w of the NDC point is 1).
        near, far = [], []
        for i in range(4):
            a = coeff(4 * i + 0)
            b = coeff(4 * i + 1)
            cc = coeff(4 * i + 2)
            d = coeff(4 * i + 3)
            base = a * x + b * y + d
            near.append(base - cc)
            far.append(base + cc)

        # NOTE: padded lanes could give w ~ 0 -> inf/NaN; they stay confined to
        # the padded lanes (no cross-lane reductions) and are never read back.
        inv_nw = _recip(near[3])
        inv_fw = _recip(far[3])
        ox = near[0] * inv_nw
        oy = near[1] * inv_nw
        oz = near[2] * inv_nw
        fx = far[0] * inv_fw
        fy = far[1] * inv_fw
        fz = far[2] * inv_fw

        dx = fx - ox
        dy = fy - oy
        dz = fz - oz
        inv_norm = lax.rsqrt(dx * dx + dy * dy + dz * dz + 1e-12)
        dx = dx * inv_norm
        dy = dy * inv_norm
        dz = dz * inv_norm

        # Unit-sphere intersection: |o + t d|^2 = 1, with |d| = 1.
        b_coef = 2.0 * (ox * dx + oy * dy + oz * dz)
        c_coef = ox * ox + oy * oy + oz * oz - 1.0
        disc = b_coef * b_coef - 4.0 * c_coef
        hit = disc >= 0.0
        s = jnp.sqrt(jnp.maximum(disc, 0.0))
        t_min = jnp.where(hit, jnp.maximum((-b_coef - s) * 0.5, 0.0), 0.0)
        t_max = jnp.where(hit, (-b_coef + s) * 0.5, 0.0)

        # Dense, lane-aligned per-plane stores (no sublane concatenate).
        out_ref[0, rows, :] = ox
        out_ref[1, rows, :] = oy
        out_ref[2, rows, :] = oz
        out_ref[3, rows, :] = dx
        out_ref[4, rows, :] = dy
        out_ref[5, rows, :] = dz
        out_ref[6, rows, :] = t_min
        out_ref[7, rows, :] = t_max

    if n_chunks == 1:
        chunk(0)
    else:
        def body(c, carry):
            chunk(pl.multiple_of(c * _CHUNK, _CHUNK))
            return carry
        # unroll=2 amortizes loop overhead while keeping the worst-case live
        # range around ~40 vregs (inside the 64-vreg file; no spill traffic).
        lax.fori_loop(0, n_chunks, body, 0, unroll=2)


def _build_inv_table(model_matrix, view_mats, proj_mats):
    """Tiny per-view inverse-MVP table, flattened to [V*16] (glue, JAX)."""
    f32 = jnp.float32
    mv = jnp.einsum("vij,jk->vik", view_mats.astype(f32),
                    model_matrix.astype(f32))
    mvp = jnp.einsum("vij,vjk->vik", proj_mats.astype(f32), mv)
    return jnp.linalg.inv(mvp).reshape(-1)


def _plan_tiles(n, block_rows):
    rows = max((n + _LANE - 1) // _LANE, 1)
    rows8 = _round_up(rows, _SUBLANE)
    ts = min(_round_up(int(block_rows), _SUBLANE), rows8)
    # Keep at least 2 grid steps whenever the problem allows it so the
    # "parallel" grid axis can be sharded across both v7x TensorCores.
    if rows8 > _SUBLANE:
        ts = min(ts, _round_up((rows8 + 1) // 2, _SUBLANE))
    ts = max(ts, _SUBLANE)
    rows_pad = _round_up(rows8, ts)
    return ts, rows_pad


def ray_builder_forward_planes(ndc, view_ids, model_matrix, view_mats,
                               proj_mats, block_rows=256):
    """Feature-major fast path.

    Returns planes [8, n_pad] (n_pad = N rounded up to tile*128); columns
    [0, N) hold [ox, oy, oz, dx, dy, dz, t_min, t_max], the rest is padding.
    Consumers that accept feature-major input should use this entry point
    directly, avoiding the extra HBM transpose pass of the [N, 8] wrapper.
    """
    f32 = jnp.float32
    ndc = ndc.astype(f32)
    n = ndc.shape[0]

    inv_table = _build_inv_table(model_matrix, view_mats, proj_mats)  # [V*16]

    ts, rows_pad = _plan_tiles(n, block_rows)
    grid = rows_pad // ts
    n_pad = rows_pad * _LANE
    pad = n_pad - n

    # Rays along lanes, sublane-dense planes. Padded view ids are 0 (a valid
    # view) so padded lanes gather real numbers.
    ndc_t = jnp.pad(ndc, ((0, pad), (0, 0))).T.reshape(2, rows_pad, _LANE)
    vid_t = jnp.pad(view_ids.astype(jnp.int32), (0, pad)).reshape(
        rows_pad, _LANE)

    out = pl.pallas_call(
        _ray_kernel,
        out_shape=jax.ShapeDtypeStruct((8, rows_pad, _LANE), f32),
        grid_spec=pltpu.PrefetchScalarGridSpec(
            num_scalar_prefetch=0,
            grid=(grid,),
            in_specs=[
                # tiny flattened per-view matrix table lives whole in SMEM
                pl.BlockSpec(memory_space=pltpu.MemorySpace.SMEM),
                pl.BlockSpec((2, ts, _LANE), lambda i: (0, i, 0)),
                pl.BlockSpec((ts, _LANE), lambda i: (i, 0)),
            ],
            out_specs=pl.BlockSpec((8, ts, _LANE), lambda i: (0, i, 0)),
        ),
        compiler_params=pltpu.CompilerParams(
            dimension_semantics=("parallel",)),
    )(inv_table, ndc_t, vid_t)

    return out.reshape(8, n_pad)


@functools.partial(jax.jit, static_argnames=("block_rows",))
def ray_builder_forward(ndc, view_ids, model_matrix, view_mats, proj_mats,
                        block_rows=256):
    """[N, 8] compatibility wrapper matching RayBuilder.forward.

    The final `.T[:n]` is a separate HBM pass kept only for API parity with
    the PyTorch module; prefer ray_builder_forward_planes downstream.
    """
    planes = ray_builder_forward_planes(ndc, view_ids, model_matrix,
                                        view_mats, proj_mats, block_rows)
    return planes.T[:ndc.shape[0]]


# ---------------------------------------------------------------------------
# Pure-JAX reference (same math, no Pallas) for correctness checking.
# ---------------------------------------------------------------------------
def _reference(ndc, view_ids, model_matrix, view_mats, proj_mats):
    mvp = proj_mats @ (view_mats @ model_matrix[None])
    inv_mvp = jnp.linalg.inv(mvp)[view_ids]            # [N, 4, 4]
    ones = jnp.ones_like(ndc[:, :1])
    p_near = jnp.concatenate([ndc, -ones, ones], -1)
    p_far = jnp.concatenate([ndc, ones, ones], -1)
    wn = jnp.einsum("nij,nj->ni", inv_mvp, p_near)
    wf = jnp.einsum("nij,nj->ni", inv_mvp, p_far)
    wn = wn[:, :3] / wn[:, 3:4]
    wf = wf[:, :3] / wf[:, 3:4]
    rays_o = wn
    d = wf - wn
    rays_d = d * jax.lax.rsqrt(jnp.sum(d * d, -1, keepdims=True) + 1e-12)
    b = 2.0 * jnp.sum(rays_o * rays_d, -1, keepdims=True)
    c = jnp.sum(rays_o * rays_o, -1, keepdims=True) - 1.0
    disc = b * b - 4.0 * c
    hit = disc >= 0
    s = jnp.sqrt(jnp.maximum(disc, 0.0))
    t_min = jnp.where(hit, jnp.maximum((-b - s) * 0.5, 0.0), 0.0)
    t_max = jnp.where(hit, (-b + s) * 0.5, 0.0)
    return jnp.concatenate([rays_o, rays_d, t_min, t_max], -1)


def _check(rays, rays_ref, atol=2e-3, rtol=2e-3):
    """allclose on o/d everywhere; on t only away from sphere tangency,
    where fp-ordering differences get amplified through sqrt(disc)."""
    o, d = rays_ref[:, :3], rays_ref[:, 3:6]
    b = 2.0 * jnp.sum(o * d, -1)
    c = jnp.sum(o * o, -1) - 1.0
    disc = b * b - 4.0 * c
    safe = jnp.abs(disc) > 1e-2
    ok_od = bool(jnp.allclose(rays[:, :6], rays_ref[:, :6],
                              atol=atol, rtol=rtol))
    err_t = jnp.abs(rays[:, 6:] - rays_ref[:, 6:])
    tol_t = atol + rtol * jnp.abs(rays_ref[:, 6:])
    ok_t = bool(jnp.all(jnp.where(safe[:, None], err_t <= tol_t, True)))
    ok_finite = bool(jnp.all(jnp.isfinite(rays)))
    return ok_od and ok_t and ok_finite


def _make_cameras(num_views):
    """Deterministic synthetic perspective projection + view matrices."""
    fov = jnp.deg2rad(60.0)
    f = 1.0 / jnp.tan(fov / 2.0)
    near, far = 0.1, 10.0
    proj = jnp.array(
        [[f, 0.0, 0.0, 0.0],
         [0.0, f, 0.0, 0.0],
         [0.0, 0.0, (far + near) / (near - far), 2 * far * near / (near - far)],
         [0.0, 0.0, -1.0, 0.0]], dtype=jnp.float32)
    proj_mats = jnp.tile(proj[None], (num_views, 1, 1))

    views = []
    for i in range(num_views):
        ang = 0.3 * i
        c, s = jnp.cos(ang), jnp.sin(ang)
        rot = jnp.array([[c, 0.0, s, 0.0],
                         [0.0, 1.0, 0.0, 0.0],
                         [-s, 0.0, c, 0.0],
                         [0.0, 0.0, 0.0, 1.0]], dtype=jnp.float32)
        trans = jnp.eye(4, dtype=jnp.float32).at[2, 3].set(-3.0 - 0.1 * i)
        views.append(trans @ rot)
    view_mats = jnp.stack(views, 0)
    return view_mats, proj_mats


if __name__ == "__main__":
    key = jax.random.PRNGKey(0)
    k1, k2, k3, k4 = jax.random.split(key, 4)

    num_views = 4
    model_matrix = jnp.eye(4, dtype=jnp.float32).at[0, 3].set(0.1)
    view_mats, proj_mats = _make_cameras(num_views)

    # --- small case: single grid step, single inner chunk -----------------
    n_small = 16
    ndc_s = jax.random.uniform(k1, (n_small, 2), jnp.float32, -1.0, 1.0)
    vid_s = jax.random.randint(k2, (n_small,), 0, num_views)
    rays_s = jax.block_until_ready(
        ray_builder_forward(ndc_s, vid_s, model_matrix, view_mats, proj_mats))
    ref_s = _reference(ndc_s, vid_s, model_matrix, view_mats, proj_mats)
    assert rays_s.shape == (n_small, 8)
    assert jnp.allclose(rays_s, ref_s, atol=2e-3, rtol=2e-3), (
        "Pallas kernel mismatch vs. reference (small case)")

    # --- larger case: grid = 2 (dual-TC path), multi-chunk inner loop ------
    n_big = 3000
    ndc_b = jax.random.uniform(k3, (n_big, 2), jnp.float32, -1.0, 1.0)
    vid_b = jax.random.randint(k4, (n_big,), 0, num_views)
    rays_b = jax.block_until_ready(
        ray_builder_forward(ndc_b, vid_b, model_matrix, view_mats, proj_mats))
    ref_b = _reference(ndc_b, vid_b, model_matrix, view_mats, proj_mats)
    assert rays_b.shape == (n_big, 8)
    assert _check(rays_b, ref_b), (
        "Pallas kernel mismatch vs. reference (large case)")

    print("KERNEL_OK")
</pallas_src>

<mosaic_0001>
module attributes {stable_mosaic.version = 11 : i64} {
  func.func @_ray_kernel(%arg0: i32, %arg1: memref<64xf32, #tpu.memory_space<smem>>, %arg2: memref<2x8x128xf32, #tpu.memory_space<vmem>>, %arg3: memref<8x128xi32, #tpu.memory_space<vmem>>, %arg4: memref<8x8x128xf32, #tpu.memory_space<vmem>>) attributes {dimension_semantics = [#tpu.dimension_semantics<parallel>], iteration_bounds = array<i64: 1>, scalar_prefetch = 0 : i64, scratch_operands = 0 : i64, tpu.core_type = #tpu.core_type<tc>, window_params = [{transform_indices = @transform_0, window_bounds = array<i64: 64>}, {transform_indices = @transform_1, window_bounds = array<i64: 2, 8, 128>}, {transform_indices = @transform_2, window_bounds = array<i64: 8, 128>}, {transform_indices = @transform_3, window_bounds = array<i64: 8, 8, 128>}]} {
    %c0 = arith.constant 0 : index
    %c0_0 = arith.constant 0 : index
    %c0_1 = arith.constant 0 : index
    %0 = vector.load %arg2[%c0, %c0_0, %c0_1] : memref<2x8x128xf32, #tpu.memory_space<vmem>>, vector<1x8x128xf32>
    %1 = vector.shape_cast %0 : vector<1x8x128xf32> to vector<8x128xf32>
    %c1 = arith.constant 1 : index
    %c0_2 = arith.constant 0 : index
    %c0_3 = arith.constant 0 : index
    %2 = vector.load %arg2[%c1, %c0_2, %c0_3] : memref<2x8x128xf32, #tpu.memory_space<vmem>>, vector<1x8x128xf32>
    %3 = vector.shape_cast %2 : vector<1x8x128xf32> to vector<8x128xf32>
    %c0_4 = arith.constant 0 : index
    %c0_5 = arith.constant 0 : index
    %4 = vector.load %arg3[%c0_4, %c0_5] : memref<8x128xi32, #tpu.memory_space<vmem>>, vector<8x128xi32>
    %c1_i32 = arith.constant 1 : i32
    %5 = vector.broadcast %c1_i32 : i32 to vector<8x128xi32>
    %6 = arith.cmpi eq, %4, %5 : vector<8x128xi32>
    %c2_i32 = arith.constant 2 : i32
    %7 = vector.broadcast %c2_i32 : i32 to vector<8x128xi32>
    %8 = arith.cmpi eq, %4, %7 : vector<8x128xi32>
    %c3_i32 = arith.constant 3 : i32
    %9 = vector.broadcast %c3_i32 : i32 to vector<8x128xi32>
    %10 = arith.cmpi eq, %4, %9 : vector<8x128xi32>
    %c0_6 = arith.constant 0 : index
    %11 = memref.load %arg1[%c0_6] : memref<64xf32, #tpu.memory_space<smem>>
    %12 = vector.broadcast %11 : f32 to vector<8x128xf32>
    %c16 = arith.constant 16 : index
    %13 = memref.load %arg1[%c16] : memref<64xf32, #tpu.memory_space<smem>>
    %14 = vector.broadcast %13 : f32 to vector<8x128xf32>
    %15 = arith.select %6, %14, %12 : vector<8x128xi1>, vector<8x128xf32>
    %c32 = arith.constant 32 : index
    %16 = memref.load %arg1[%c32] : memref<64xf32, #tpu.memory_space<smem>>
    %17 = vector.broadcast %16 : f32 to vector<8x128xf32>
    %18 = arith.select %8, %17, %15 : vector<8x128xi1>, vector<8x128xf32>
    %c48 = arith.constant 48 : index
    %19 = memref.load %arg1[%c48] : memref<64xf32, #tpu.memory_space<smem>>
    %20 = vector.broadcast %19 : f32 to vector<8x128xf32>
    %21 = arith.select %10, %20, %18 : vector<8x128xi1>, vector<8x128xf32>
    %c1_7 = arith.constant 1 : index
    %22 = memref.load %arg1[%c1_7] : memref<64xf32, #tpu.memory_space<smem>>
    %23 = vector.broadcast %22 : f32 to vector<8x128xf32>
    %c17 = arith.constant 17 : index
    %24 = memref.load %arg1[%c17] : memref<64xf32, #tpu.memory_space<smem>>
    %25 = vector.broadcast %24 : f32 to vector<8x128xf32>
    %26 = arith.select %6, %25, %23 : vector<8x128xi1>, vector<8x128xf32>
    %c33 = arith.constant 33 : index
    %27 = memref.load %arg1[%c33] : memref<64xf32, #tpu.memory_space<smem>>
    %28 = vector.broadcast %27 : f32 to vector<8x128xf32>
    %29 = arith.select %8, %28, %26 : vector<8x128xi1>, vector<8x128xf32>
    %c49 = arith.constant 49 : index
    %30 = memref.load %arg1[%c49] : memref<64xf32, #tpu.memory_space<smem>>
    %31 = vector.broadcast %30 : f32 to vector<8x128xf32>
    %32 = arith.select %10, %31, %29 : vector<8x128xi1>, vector<8x128xf32>
    %c2 = arith.constant 2 : index
    %33 = memref.load %arg1[%c2] : memref<64xf32, #tpu.memory_space<smem>>
    %34 = vector.broadcast %33 : f32 to vector<8x128xf32>
    %c18 = arith.constant 18 : index
    %35 = memref.load %arg1[%c18] : memref<64xf32, #tpu.memory_space<smem>>
    %36 = vector.broadcast %35 : f32 to vector<8x128xf32>
    %37 = arith.select %6, %36, %34 : vector<8x128xi1>, vector<8x128xf32>
    %c34 = arith.constant 34 : index
    %38 = memref.load %arg1[%c34] : memref<64xf32, #tpu.memory_space<smem>>
    %39 = vector.broadcast %38 : f32 to vector<8x128xf32>
    %40 = arith.select %8, %39, %37 : vector<8x128xi1>, vector<8x128xf32>
    %c50 = arith.constant 50 : index
    %41 = memref.load %arg1[%c50] : memref<64xf32, #tpu.memory_space<smem>>
    %42 = vector.broadcast %41 : f32 to vector<8x128xf32>
    %43 = arith.select %10, %42, %40 : vector<8x128xi1>, vector<8x128xf32>
    %c3 = arith.constant 3 : index
    %44 = memref.load %arg1[%c3] : memref<64xf32, #tpu.memory_space<smem>>
    %45 = vector.broadcast %44 : f32 to vector<8x128xf32>
    %c19 = arith.constant 19 : index
    %46 = memref.load %arg1[%c19] : memref<64xf32, #tpu.memory_space<smem>>
    %47 = vector.broadcast %46 : f32 to vector<8x128xf32>
    %48 = arith.select %6, %47, %45 : vector<8x128xi1>, vector<8x128xf32>
    %c35 = arith.constant 35 : index
    %49 = memref.load %arg1[%c35] : memref<64xf32, #tpu.memory_space<smem>>
    %50 = vector.broadcast %49 : f32 to vector<8x128xf32>
    %51 = arith.select %8, %50, %48 : vector<8x128xi1>, vector<8x128xf32>
    %c51 = arith.constant 51 : index
    %52 = memref.load %arg1[%c51] : memref<64xf32, #tpu.memory_space<smem>>
    %53 = vector.broadcast %52 : f32 to vector<8x128xf32>
    %54 = arith.select %10, %53, %51 : vector<8x128xi1>, vector<8x128xf32>
    %55 = arith.mulf %21, %1 : vector<8x128xf32>
    %56 = arith.mulf %32, %3 : vector<8x128xf32>
    %57 = arith.addf %55, %56 : vector<8x128xf32>
    %58 = arith.addf %57, %54 : vector<8x128xf32>
    %59 = arith.subf %58, %43 : vector<8x128xf32>
    %60 = arith.addf %58, %43 : vector<8x128xf32>
    %c4 = arith.constant 4 : index
    %61 = memref.load %arg1[%c4] : memref<64xf32, #tpu.memory_space<smem>>
    %62 = vector.broadcast %61 : f32 to vector<8x128xf32>
    %c20 = arith.constant 20 : index
    %63 = memref.load %arg1[%c20] : memref<64xf32, #tpu.memory_space<smem>>
    %64 = vector.broadcast %63 : f32 to vector<8x128xf32>
    %65 = arith.select %6, %64, %62 : vector<8x128xi1>, vector<8x128xf32>
    %c36 = arith.constant 36 : index
    %66 = memref.load %arg1[%c36] : memref<64xf32, #tpu.memory_space<smem>>
    %67 = vector.broadcast %66 : f32 to vector<8x128xf32>
    %68 = arith.select %8, %67, %65 : vector<8x128xi1>, vector<8x128xf32>
    %c52 = arith.constant 52 : index
    %69 = memref.load %arg1[%c52] : memref<64xf32, #tpu.memory_space<smem>>
    %70 = vector.broadcast %69 : f32 to vector<8x128xf32>
    %71 = arith.select %10, %70, %68 : vector<8x128xi1>, vector<8x128xf32>
    %c5 = arith.constant 5 : index
    %72 = memref.load %arg1[%c5] : memref<64xf32, #tpu.memory_space<smem>>
    %73 = vector.broadcast %72 : f32 to vector<8x128xf32>
    %c21 = arith.constant 21 : index
    %74 = memref.load %arg1[%c21] : memref<64xf32, #tpu.memory_space<smem>>
    %75 = vector.broadcast %74 : f32 to vector<8x128xf32>
    %76 = arith.select %6, %75, %73 : vector<8x128xi1>, vector<8x128xf32>
    %c37 = arith.constant 37 : index
    %77 = memref.load %arg1[%c37] : memref<64xf32, #tpu.memory_space<smem>>
    %78 = vector.broadcast %77 : f32 to vector<8x128xf32>
    %79 = arith.select %8, %78, %76 : vector<8x128xi1>, vector<8x128xf32>
    %c53 = arith.constant 53 : index
    %80 = memref.load %arg1[%c53] : memref<64xf32, #tpu.memory_space<smem>>
    %81 = vector.broadcast %80 : f32 to vector<8x128xf32>
    %82 = arith.select %10, %81, %79 : vector<8x128xi1>, vector<8x128xf32>
    %c6 = arith.constant 6 : index
    %83 = memref.load %arg1[%c6] : memref<64xf32, #tpu.memory_space<smem>>
    %84 = vector.broadcast %83 : f32 to vector<8x128xf32>
    %c22 = arith.constant 22 : index
    %85 = memref.load %arg1[%c22] : memref<64xf32, #tpu.memory_space<smem>>
    %86 = vector.broadcast %85 : f32 to vector<8x128xf32>
    %87 = arith.select %6, %86, %84 : vector<8x128xi1>, vector<8x128xf32>
    %c38 = arith.constant 38 : index
    %88 = memref.load %arg1[%c38] : memref<64xf32, #tpu.memory_space<smem>>
    %89 = vector.broadcast %88 : f32 to vector<8x128xf32>
    %90 = arith.select %8, %89, %87 : vector<8x128xi1>, vector<8x128xf32>
    %c54 = arith.constant 54 : index
    %91 = memref.load %arg1[%c54] : memref<64xf32, #tpu.memory_space<smem>>
    %92 = vector.broadcast %91 : f32 to vector<8x128xf32>
    %93 = arith.select %10, %92, %90 : vector<8x128xi1>, vector<8x128xf32>
    %c7 = arith.constant 7 : index
    %94 = memref.load %arg1[%c7] : memref<64xf32, #tpu.memory_space<smem>>
    %95 = vector.broadcast %94 : f32 to vector<8x128xf32>
    %c23 = arith.constant 23 : index
    %96 = memref.load %arg1[%c23] : memref<64xf32, #tpu.memory_space<smem>>
    %97 = vector.broadcast %96 : f32 to vector<8x128xf32>
    %98 = arith.select %6, %97, %95 : vector<8x128xi1>, vector<8x128xf32>
    %c39 = arith.constant 39 : index
    %99 = memref.load %arg1[%c39] : memref<64xf32, #tpu.memory_space<smem>>
    %100 = vector.broadcast %99 : f32 to vector<8x128xf32>
    %101 = arith.select %8, %100, %98 : vector<8x128xi1>, vector<8x128xf32>
    %c55 = arith.constant 55 : index
    %102 = memref.load %arg1[%c55] : memref<64xf32, #tpu.memory_space<smem>>
    %103 = vector.broadcast %102 : f32 to vector<8x128xf32>
    %104 = arith.select %10, %103, %101 : vector<8x128xi1>, vector<8x128xf32>
    %105 = arith.mulf %71, %1 : vector<8x128xf32>
    %106 = arith.mulf %82, %3 : vector<8x128xf32>
    %107 = arith.addf %105, %106 : vector<8x128xf32>
    %108 = arith.addf %107, %104 : vector<8x128xf32>
    %109 = arith.subf %108, %93 : vector<8x128xf32>
    %110 = arith.addf %108, %93 : vector<8x128xf32>
    %c8 = arith.constant 8 : index
    %111 = memref.load %arg1[%c8] : memref<64xf32, #tpu.memory_space<smem>>
    %112 = vector.broadcast %111 : f32 to vector<8x128xf32>
    %c24 = arith.constant 24 : index
    %113 = memref.load %arg1[%c24] : memref<64xf32, #tpu.memory_space<smem>>
    %114 = vector.broadcast %113 : f32 to vector<8x128xf32>
    %115 = arith.select %6, %114, %112 : vector<8x128xi1>, vector<8x128xf32>
    %c40 = arith.constant 40 : index
    %116 = memref.load %arg1[%c40] : memref<64xf32, #tpu.memory_space<smem>>
    %117 = vector.broadcast %116 : f32 to vector<8x128xf32>
    %118 = arith.select %8, %117, %115 : vector<8x128xi1>, vector<8x128xf32>
    %c56 = arith.constant 56 : index
    %119 = memref.load %arg1[%c56] : memref<64xf32, #tpu.memory_space<smem>>
    %120 = vector.broadcast %119 : f32 to vector<8x128xf32>
    %121 = arith.select %10, %120, %118 : vector<8x128xi1>, vector<8x128xf32>
    %c9 = arith.constant 9 : index
    %122 = memref.load %arg1[%c9] : memref<64xf32, #tpu.memory_space<smem>>
    %123 = vector.broadcast %122 : f32 to vector<8x128xf32>
    %c25 = arith.constant 25 : index
    %124 = memref.load %arg1[%c25] : memref<64xf32, #tpu.memory_space<smem>>
    %125 = vector.broadcast %124 : f32 to vector<8x128xf32>
    %126 = arith.select %6, %125, %123 : vector<8x128xi1>, vector<8x128xf32>
    %c41 = arith.constant 41 : index
    %127 = memref.load %arg1[%c41] : memref<64xf32, #tpu.memory_space<smem>>
    %128 = vector.broadcast %127 : f32 to vector<8x128xf32>
    %129 = arith.select %8, %128, %126 : vector<8x128xi1>, vector<8x128xf32>
    %c57 = arith.constant 57 : index
    %130 = memref.load %arg1[%c57] : memref<64xf32, #tpu.memory_space<smem>>
    %131 = vector.broadcast %130 : f32 to vector<8x128xf32>
    %132 = arith.select %10, %131, %129 : vector<8x128xi1>, vector<8x128xf32>
    %c10 = arith.constant 10 : index
    %133 = memref.load %arg1[%c10] : memref<64xf32, #tpu.memory_space<smem>>
    %134 = vector.broadcast %133 : f32 to vector<8x128xf32>
    %c26 = arith.constant 26 : index
    %135 = memref.load %arg1[%c26] : memref<64xf32, #tpu.memory_space<smem>>
    %136 = vector.broadcast %135 : f32 to vector<8x128xf32>
    %137 = arith.select %6, %136, %134 : vector<8x128xi1>, vector<8x128xf32>
    %c42 = arith.constant 42 : index
    %138 = memref.load %arg1[%c42] : memref<64xf32, #tpu.memory_space<smem>>
    %139 = vector.broadcast %138 : f32 to vector<8x128xf32>
    %140 = arith.select %8, %139, %137 : vector<8x128xi1>, vector<8x128xf32>
    %c58 = arith.constant 58 : index
    %141 = memref.load %arg1[%c58] : memref<64xf32, #tpu.memory_space<smem>>
    %142 = vector.broadcast %141 : f32 to vector<8x128xf32>
    %143 = arith.select %10, %142, %140 : vector<8x128xi1>, vector<8x128xf32>
    %c11 = arith.constant 11 : index
    %144 = memref.load %arg1[%c11] : memref<64xf32, #tpu.memory_space<smem>>
    %145 = vector.broadcast %144 : f32 to vector<8x128xf32>
    %c27 = arith.constant 27 : index
    %146 = memref.load %arg1[%c27] : memref<64xf32, #tpu.memory_space<smem>>
    %147 = vector.broadcast %146 : f32 to vector<8x128xf32>
    %148 = arith.select %6, %147, %145 : vector<8x128xi1>, vector<8x128xf32>
    %c43 = arith.constant 43 : index
    %149 = memref.load %arg1[%c43] : memref<64xf32, #tpu.memory_space<smem>>
    %150 = vector.broadcast %149 : f32 to vector<8x128xf32>
    %151 = arith.select %8, %150, %148 : vector<8x128xi1>, vector<8x128xf32>
    %c59 = arith.constant 59 : index
    %152 = memref.load %arg1[%c59] : memref<64xf32, #tpu.memory_space<smem>>
    %153 = vector.broadcast %152 : f32 to vector<8x128xf32>
    %154 = arith.select %10, %153, %151 : vector<8x128xi1>, vector<8x128xf32>
    %155 = arith.mulf %121, %1 : vector<8x128xf32>
    %156 = arith.mulf %132, %3 : vector<8x128xf32>
    %157 = arith.addf %155, %156 : vector<8x128xf32>
    %158 = arith.addf %157, %154 : vector<8x128xf32>
    %159 = arith.subf %158, %143 : vector<8x128xf32>
    %160 = arith.addf %158, %143 : vector<8x128xf32>
    %c12 = arith.constant 12 : index
    %161 = memref.load %arg1[%c12] : memref<64xf32, #tpu.memory_space<smem>>
    %162 = vector.broadcast %161 : f32 to vector<8x128xf32>
    %c28 = arith.constant 28 : index
    %163 = memref.load %arg1[%c28] : memref<64xf32, #tpu.memory_space<smem>>
    %164 = vector.broadcast %163 : f32 to vector<8x128xf32>
    %165 = arith.select %6, %164, %162 : vector<8x128xi1>, vector<8x128xf32>
    %c44 = arith.constant 44 : index
    %166 = memref.load %arg1[%c44] : memref<64xf32, #tpu.memory_space<smem>>
    %167 = vector.broadcast %166 : f32 to vector<8x128xf32>
    %168 = arith.select %8, %167, %165 : vector<8x128xi1>, vector<8x128xf32>
    %c60 = arith.constant 60 : index
    %169 = memref.load %arg1[%c60] : memref<64xf32, #tpu.memory_space<smem>>
    %170 = vector.broadcast %169 : f32 to vector<8x128xf32>
    %171 = arith.select %10, %170, %168 : vector<8x128xi1>, vector<8x128xf32>
    %c13 = arith.constant 13 : index
    %172 = memref.load %arg1[%c13] : memref<64xf32, #tpu.memory_space<smem>>
    %173 = vector.broadcast %172 : f32 to vector<8x128xf32>
    %c29 = arith.constant 29 : index
    %174 = memref.load %arg1[%c29] : memref<64xf32, #tpu.memory_space<smem>>
    %175 = vector.broadcast %174 : f32 to vector<8x128xf32>
    %176 = arith.select %6, %175, %173 : vector<8x128xi1>, vector<8x128xf32>
    %c45 = arith.constant 45 : index
    %177 = memref.load %arg1[%c45] : memref<64xf32, #tpu.memory_space<smem>>
    %178 = vector.broadcast %177 : f32 to vector<8x128xf32>
    %179 = arith.select %8, %178, %176 : vector<8x128xi1>, vector<8x128xf32>
    %c61 = arith.constant 61 : index
    %180 = memref.load %arg1[%c61] : memref<64xf32, #tpu.memory_space<smem>>
    %181 = vector.broadcast %180 : f32 to vector<8x128xf32>
    %182 = arith.select %10, %181, %179 : vector<8x128xi1>, vector<8x128xf32>
    %c14 = arith.constant 14 : index
    %183 = memref.load %arg1[%c14] : memref<64xf32, #tpu.memory_space<smem>>
    %184 = vector.broadcast %183 : f32 to vector<8x128xf32>
    %c30 = arith.constant 30 : index
    %185 = memref.load %arg1[%c30] : memref<64xf32, #tpu.memory_space<smem>>
    %186 = vector.broadcast %185 : f32 to vector<8x128xf32>
    %187 = arith.select %6, %186, %184 : vector<8x128xi1>, vector<8x128xf32>
    %c46 = arith.constant 46 : index
    %188 = memref.load %arg1[%c46] : memref<64xf32, #tpu.memory_space<smem>>
    %189 = vector.broadcast %188 : f32 to vector<8x128xf32>
    %190 = arith.select %8, %189, %187 : vector<8x128xi1>, vector<8x128xf32>
    %c62 = arith.constant 62 : index
    %191 = memref.load %arg1[%c62] : memref<64xf32, #tpu.memory_space<smem>>
    %192 = vector.broadcast %191 : f32 to vector<8x128xf32>
    %193 = arith.select %10, %192, %190 : vector<8x128xi1>, vector<8x128xf32>
    %c15 = arith.constant 15 : index
    %194 = memref.load %arg1[%c15] : memref<64xf32, #tpu.memory_space<smem>>
    %195 = vector.broadcast %194 : f32 to vector<8x128xf32>
    %c31 = arith.constant 31 : index
    %196 = memref.load %arg1[%c31] : memref<64xf32, #tpu.memory_space<smem>>
    %197 = vector.broadcast %196 : f32 to vector<8x128xf32>
    %198 = arith.select %6, %197, %195 : vector<8x128xi1>, vector<8x128xf32>
    %c47 = arith.constant 47 : index
    %199 = memref.load %arg1[%c47] : memref<64xf32, #tpu.memory_space<smem>>
    %200 = vector.broadcast %199 : f32 to vector<8x128xf32>
    %201 = arith.select %8, %200, %198 : vector<8x128xi1>, vector<8x128xf32>
    %c63 = arith.constant 63 : index
    %202 = memref.load %arg1[%c63] : memref<64xf32, #tpu.memory_space<smem>>
    %203 = vector.broadcast %202 : f32 to vector<8x128xf32>
    %204 = arith.select %10, %203, %201 : vector<8x128xi1>, vector<8x128xf32>
    %205 = arith.mulf %171, %1 : vector<8x128xf32>
    %206 = arith.mulf %182, %3 : vector<8x128xf32>
    %207 = arith.addf %205, %206 : vector<8x128xf32>
    %208 = arith.addf %207, %204 : vector<8x128xf32>
    %209 = arith.subf %208, %193 : vector<8x128xf32>
    %210 = arith.addf %208, %193 : vector<8x128xf32>
    %211 = tpu.reciprocal %209 {approx = true} : vector<8x128xf32> -> vector<8x128xf32>
    %212 = arith.mulf %209, %211 : vector<8x128xf32>
    %cst = arith.constant 2.000000e+00 : f32
    %213 = vector.broadcast %cst : f32 to vector<8x128xf32>
    %214 = arith.subf %213, %212 : vector<8x128xf32>
    %215 = arith.mulf %211, %214 : vector<8x128xf32>
    %216 = tpu.reciprocal %210 {approx = true} : vector<8x128xf32> -> vector<8x128xf32>
    %217 = arith.mulf %210, %216 : vector<8x128xf32>
    %cst_8 = arith.constant 2.000000e+00 : f32
    %218 = vector.broadcast %cst_8 : f32 to vector<8x128xf32>
    %219 = arith.subf %218, %217 : vector<8x128xf32>
    %220 = arith.mulf %216, %219 : vector<8x128xf32>
    %221 = arith.mulf %59, %215 : vector<8x128xf32>
    %222 = arith.mulf %109, %215 : vector<8x128xf32>
    %223 = arith.mulf %159, %215 : vector<8x128xf32>
    %224 = arith.mulf %60, %220 : vector<8x128xf32>
    %225 = arith.mulf %110, %220 : vector<8x128xf32>
    %226 = arith.mulf %160, %220 : vector<8x128xf32>
    %227 = arith.subf %224, %221 : vector<8x128xf32>
    %228 = arith.subf %225, %222 : vector<8x128xf32>
    %229 = arith.subf %226, %223 : vector<8x128xf32>
    %230 = arith.mulf %227, %227 : vector<8x128xf32>
    %231 = arith.mulf %228, %228 : vector<8x128xf32>
    %232 = arith.addf %230, %231 : vector<8x128xf32>
    %233 = arith.mulf %229, %229 : vector<8x128xf32>
    %234 = arith.addf %232, %233 : vector<8x128xf32>
    %cst_9 = arith.constant 9.99999996E-13 : f32
    %235 = vector.broadcast %cst_9 : f32 to vector<8x128xf32>
    %236 = arith.addf %234, %235 : vector<8x128xf32>
    %237 = math.rsqrt %236 : vector<8x128xf32>
    %238 = arith.mulf %227, %237 : vector<8x128xf32>
    %239 = arith.mulf %228, %237 : vector<8x128xf32>
    %240 = arith.mulf %229, %237 : vector<8x128xf32>
    %241 = arith.mulf %221, %238 : vector<8x128xf32>
    %242 = arith.mulf %222, %239 : vector<8x128xf32>
    %243 = arith.addf %241, %242 : vector<8x128xf32>
    %244 = arith.mulf %223, %240 : vector<8x128xf32>
    %245 = arith.addf %243, %244 : vector<8x128xf32>
    %cst_10 = arith.constant 2.000000e+00 : f32
    %246 = vector.broadcast %cst_10 : f32 to vector<8x128xf32>
    %247 = arith.mulf %246, %245 : vector<8x128xf32>
    %248 = arith.mulf %221, %221 : vector<8x128xf32>
    %249 = arith.mulf %222, %222 : vector<8x128xf32>
    %250 = arith.addf %248, %249 : vector<8x128xf32>
    %251 = arith.mulf %223, %223 : vector<8x128xf32>
    %252 = arith.addf %250, %251 : vector<8x128xf32>
    %cst_11 = arith.constant 1.000000e+00 : f32
    %253 = vector.broadcast %cst_11 : f32 to vector<8x128xf32>
    %254 = arith.subf %252, %253 : vector<8x128xf32>
    %255 = arith.mulf %247, %247 : vector<8x128xf32>
    %cst_12 = arith.constant 4.000000e+00 : f32
    %256 = vector.broadcast %cst_12 : f32 to vector<8x128xf32>
    %257 = arith.mulf %256, %254 : vector<8x128xf32>
    %258 = arith.subf %255, %257 : vector<8x128xf32>
    %cst_13 = arith.constant 0.000000e+00 : f32
    %259 = vector.broadcast %cst_13 : f32 to vector<8x128xf32>
    %260 = arith.cmpf oge, %258, %259 : vector<8x128xf32>
    %cst_14 = arith.constant 0.000000e+00 : f32
    %261 = vector.broadcast %cst_14 : f32 to vector<8x128xf32>
    %262 = arith.maximumf %258, %261 : vector<8x128xf32>
    %263 = math.sqrt %262 : vector<8x128xf32>
    %cst_15 = arith.constant 0.000000e+00 : f32
    %264 = vector.broadcast %cst_15 : f32 to vector<8x128xf32>
    %265 = arith.subf %264, %247 : vector<8x128xf32>
    %266 = arith.subf %265, %263 : vector<8x128xf32>
    %cst_16 = arith.constant 5.000000e-01 : f32
    %267 = vector.broadcast %cst_16 : f32 to vector<8x128xf32>
    %268 = arith.mulf %266, %267 : vector<8x128xf32>
    %cst_17 = arith.constant 0.000000e+00 : f32
    %269 = vector.broadcast %cst_17 : f32 to vector<8x128xf32>
    %270 = arith.maximumf %268, %269 : vector<8x128xf32>
    %cst_18 = arith.constant 0.000000e+00 : f32
    %271 = vector.broadcast %cst_18 : f32 to vector<8x128xf32>
    %272 = arith.select %260, %270, %271 : vector<8x128xi1>, vector<8x128xf32>
    %cst_19 = arith.constant 0.000000e+00 : f32
    %273 = vector.broadcast %cst_19 : f32 to vector<8x128xf32>
    %274 = arith.subf %273, %247 : vector<8x128xf32>
    %275 = arith.addf %274, %263 : vector<8x128xf32>
    %cst_20 = arith.constant 5.000000e-01 : f32
    %276 = vector.broadcast %cst_20 : f32 to vector<8x128xf32>
    %277 = arith.mulf %275, %276 : vector<8x128xf32>
    %cst_21 = arith.constant 0.000000e+00 : f32
    %278 = vector.broadcast %cst_21 : f32 to vector<8x128xf32>
    %279 = arith.select %260, %277, %278 : vector<8x128xi1>, vector<8x128xf32>
    %c0_22 = arith.constant 0 : index
    %c0_23 = arith.constant 0 : index
    %c0_24 = arith.constant 0 : index
    %280 = vector.load %arg4[%c0_22, %c0_23, %c0_24] : memref<8x8x128xf32, #tpu.memory_space<vmem>>, vector<1x8x128xf32>
    %281 = vector.shape_cast %280 : vector<1x8x128xf32> to vector<8x128xf32>
    %282 = vector.shape_cast %221 : vector<8x128xf32> to vector<1x8x128xf32>
    tpu.vector_store %arg4[%c0_22, %c0_23, %c0_24], %282 {strides = array<i32>} : memref<8x8x128xf32, #tpu.memory_space<vmem>>, vector<1x8x128xf32>,
    %c1_25 = arith.constant 1 : index
    %c0_26 = arith.constant 0 : index
    %c0_27 = arith.constant 0 : index
    %283 = vector.load %arg4[%c1_25, %c0_26, %c0_27] : memref<8x8x128xf32, #tpu.memory_space<vmem>>, vector<1x8x128xf32>
    %284 = vector.shape_cast %283 : vector<1x8x128xf32> to vector<8x128xf32>
    %285 = vector.shape_cast %222 : vector<8x128xf32> to vector<1x8x128xf32>
    tpu.vector_store %arg4[%c1_25, %c0_26, %c0_27], %285 {strides = array<i32>} : memref<8x8x128xf32, #tpu.memory_space<vmem>>, vector<1x8x128xf32>,
    %c2_28 = arith.constant 2 : index
    %c0_29 = arith.constant 0 : index
    %c0_30 = arith.constant 0 : index
    %286 = vector.load %arg4[%c2_28, %c0_29, %c0_30] : memref<8x8x128xf32, #tpu.memory_space<vmem>>, vector<1x8x128xf32>
    %287 = vector.shape_cast %286 : vector<1x8x128xf32> to vector<8x128xf32>
    %288 = vector.shape_cast %223 : vector<8x128xf32> to vector<1x8x128xf32>
    tpu.vector_store %arg4[%c2_28, %c0_29, %c0_30], %288 {strides = array<i32>} : memref<8x8x128xf32, #tpu.memory_space<vmem>>, vector<1x8x128xf32>,
    %c3_31 = arith.constant 3 : index
    %c0_32 = arith.constant 0 : index
    %c0_33 = arith.constant 0 : index
    %289 = vector.load %arg4[%c3_31, %c0_32, %c0_33] : memref<8x8x128xf32, #tpu.memory_space<vmem>>, vector<1x8x128xf32>
    %290 = vector.shape_cast %289 : vector<1x8x128xf32> to vector<8x128xf32>
    %291 = vector.shape_cast %238 : vector<8x128xf32> to vector<1x8x128xf32>
    tpu.vector_store %arg4[%c3_31, %c0_32, %c0_33], %291 {strides = array<i32>} : memref<8x8x128xf32, #tpu.memory_space<vmem>>, vector<1x8x128xf32>,
    %c4_34 = arith.constant 4 : index
    %c0_35 = arith.constant 0 : index
    %c0_36 = arith.constant 0 : index
    %292 = vector.load %arg4[%c4_34, %c0_35, %c0_36] : memref<8x8x128xf32, #tpu.memory_space<vmem>>, vector<1x8x128xf32>
    %293 = vector.shape_cast %292 : vector<1x8x128xf32> to vector<8x128xf32>
    %294 = vector.shape_cast %239 : vector<8x128xf32> to vector<1x8x128xf32>
    tpu.vector_store %arg4[%c4_34, %c0_35, %c0_36], %294 {strides = array<i32>} : memref<8x8x128xf32, #tpu.memory_space<vmem>>, vector<1x8x128xf32>,
    %c5_37 = arith.constant 5 : index
    %c0_38 = arith.constant 0 : index
    %c0_39 = arith.constant 0 : index
    %295 = vector.load %arg4[%c5_37, %c0_38, %c0_39] : memref<8x8x128xf32, #tpu.memory_space<vmem>>, vector<1x8x128xf32>
    %296 = vector.shape_cast %295 : vector<1x8x128xf32> to vector<8x128xf32>
    %297 = vector.shape_cast %240 : vector<8x128xf32> to vector<1x8x128xf32>
    tpu.vector_store %arg4[%c5_37, %c0_38, %c0_39], %297 {strides = array<i32>} : memref<8x8x128xf32, #tpu.memory_space<vmem>>, vector<1x8x128xf32>,
    %c6_40 = arith.constant 6 : index
    %c0_41 = arith.constant 0 : index
    %c0_42 = arith.constant 0 : index
    %298 = vector.load %arg4[%c6_40, %c0_41, %c0_42] : memref<8x8x128xf32, #tpu.memory_space<vmem>>, vector<1x8x128xf32>
    %299 = vector.shape_cast %298 : vector<1x8x128xf32> to vector<8x128xf32>
    %300 = vector.shape_cast %272 : vector<8x128xf32> to vector<1x8x128xf32>
    tpu.vector_store %arg4[%c6_40, %c0_41, %c0_42], %300 {strides = array<i32>} : memref<8x8x128xf32, #tpu.memory_space<vmem>>, vector<1x8x128xf32>,
    %c7_43 = arith.constant 7 : index
    %c0_44 = arith.constant 0 : index
    %c0_45 = arith.constant 0 : index
    %301 = vector.load %arg4[%c7_43, %c0_44, %c0_45] : memref<8x8x128xf32, #tpu.memory_space<vmem>>, vector<1x8x128xf32>
    %302 = vector.shape_cast %301 : vector<1x8x128xf32> to vector<8x128xf32>
    %303 = vector.shape_cast %279 : vector<8x128xf32> to vector<1x8x128xf32>
    tpu.vector_store %arg4[%c7_43, %c0_44, %c0_45], %303 {strides = array<i32>} : memref<8x8x128xf32, #tpu.memory_space<vmem>>, vector<1x8x128xf32>,
    return
  }
  func.func @transform_0(%arg0: i32) -> i32 {
    %c0_i32 = arith.constant 0 : i32
    %c0_i32_0 = arith.constant 0 : i32
    return %c0_i32 : i32
  }
  func.func @transform_1(%arg0: i32) -> (i32, i32, i32) {
    %c0_i32 = arith.constant 0 : i32
    %c0_i32_0 = arith.constant 0 : i32
    %c0_i32_1 = arith.constant 0 : i32
    return %c0_i32, %arg0, %c0_i32_0 : i32, i32, i32
  }
  func.func @transform_2(%arg0: i32) -> (i32, i32) {
    %c0_i32 = arith.constant 0 : i32
    %c0_i32_0 = arith.constant 0 : i32
    return %arg0, %c0_i32 : i32, i32
  }
  func.func @transform_3(%arg0: i32) -> (i32, i32, i32) {
    %c0_i32 = arith.constant 0 : i32
    %c0_i32_0 = arith.constant 0 : i32
    %c0_i32_1 = arith.constant 0 : i32
    return %c0_i32, %arg0, %c0_i32_0 : i32, i32, i32
  }
}

</mosaic_0001>

<llo_original>
// kernel: custom-call.11
$region0: #{custom-call.11}
  %s0 = inlined_call_operand.vmem [shape: f32[4,4,4], index: 0, kind: input, shape index: {}]
  %s1 = inlined_call_operand.vmem [shape: f32[4,4,4], index: 1, kind: output, shape index: {0}]
  %s2 = inlined_call_operand.hbm [shape: s32[4,4], index: 2, kind: output, shape index: {1}]
  %s3 = inlined_call_operand.vmem [shape: s32[4,4], index: 3, kind: output, shape index: {2}]
  %4 = xla_tuple %s1, %s2, %s3
  $region1: #{custom-call.11} parent=0
    #allocation0 [shape = 'u8[4096]{0}', space=vmem, size = 0x1000, scoped, tag = 'operand span for operand 0']
    #allocation1 [shape = 'u8[4096]{0}', space=vmem, size = 0x1000, scoped, tag = 'packed  for operand 0']
    #allocation2 [shape = 'u8[4096]{0}', space=vmem, size = 0x1000, scoped, tag = 'operand span for operand 1']
    #allocation3 [shape = 'u8[4096]{0}', space=vmem, size = 0x1000, scoped, tag = 'packed  for operand 1']
    #allocation4 [shape = 'u8[4096]{0}', space=vmem, size = 0x1000, scoped, tag = 'operand span for operand 2']
    #allocation5 [shape = 'u8[4096]{0}', space=vmem, size = 0x1000, scoped, tag = 'packed  for operand 2']
    #allocation6 [shape = 's32[2]{0}', space=sflag, size = 0x8, scoped, tag = 'scoped memory for custom-call.11']
    #allocation7 [shape = 'u8[4096]{0}', space=vmem, size = 0x1000, scoped, tag = 'operand span for operand 3']
    #allocation8 [shape = 'u8[4096]{0}', space=vmem, size = 0x1000, scoped, tag = 'packed  for operand 3']
    %5 = vsyncpa [#allocation6], 0
    %s6 = scalar_lea.sflag [#allocation6], 1
    %7 = vsyncpa %s6, 0
    loop: start=0, step=1, limit=6
    $region2: #{custom-call.11} parent=1 // loop_pre_header
      _
    $region3: #{custom-call.11} parent=1 // loop_header
      %s9 = sphi 0, %s13
      %p10 = scmp.ge.s32.totalorder %s9, 6
      %s21 = sphi 0, %s23
      %s24 = sphi 0, %s21
      %s25 = sphi 0, %s24
      %s41 = sphi 0, %s25
      %s49 = sphi 0, %s51
      %s52 = sphi 0, %s49
      %s53 = sphi 0, %s52
      %s69 = sphi 0, %s53
    $region4: #{custom-call.11} parent=1 // loop_header_branch
      %12 = sbr.rel (%p10) target = $region8
    $region5: #{custom-call.11} parent=1 // loop_body
      %s14 = ssub.s32 %s9, 1
      %s15 = ssub.s32 %s9, 2
      %s16 = sadd.s32 %s9, 1
      %s17 = sshrl.u32 %s9, 3
      %s18 = sshrl.u32 %s16, 3
      %s19 = ssub.s32 %s17, %s18
      %p20 = scmp.eq.s32.totalorder %s19, 0
      %s22 = sadd.s32 %s21, 1
      %s23 = scalar_select %p20, %s21, %s22
      %p26 = pneg %p20
      %p27 = scmp.eq.s32.totalorder %s9, 3
      %p28 = por %p26, %p27
      %p29 = scmp.ne.s32.totalorder %s21, %s24
      %p30 = scmp.eq.s32.totalorder %s9, 0
      %p31 = por %p29, %p30
      %p32 = scmp.ne.s32.totalorder %s21, %s24
      %p33 = scmp.eq.s32.totalorder %s14, 3
      %p34 = por %p32, %p33
      %p35 = scmp.ne.s32.totalorder %s24, %s25
      %p36 = scmp.eq.s32.totalorder %s14, 0
      %p37 = por %p35, %p36
      %p38 = scmp.ne.s32.totalorder %s24, %s25
      %p39 = scmp.eq.s32.totalorder %s15, 3
      %p40 = por %p38, %p39
      %p42 = scmp.ne.s32.totalorder %s25, %s41
      %p43 = scmp.eq.s32.totalorder %s15, 0
      %p44 = por %p42, %p43
      %s45 = sshrl.u32 %s9, 3
      %s46 = sshrl.u32 %s16, 3
      %s47 = ssub.s32 %s45, %s46
      %p48 = scmp.eq.s32.totalorder %s47, 0
      %s50 = sadd.s32 %s49, 1
      %s51 = scalar_select %p48, %s49, %s50
      %p54 = pneg %p48
      %p55 = scmp.eq.s32.totalorder %s9, 3
      %p56 = por %p54, %p55
      %p57 = scmp.ne.s32.totalorder %s49, %s52
      %p58 = scmp.eq.s32.totalorder %s9, 0
      %p59 = por %p57, %p58
      %p60 = scmp.ne.s32.totalorder %s49, %s52
      %p61 = scmp.eq.s32.totalorder %s14, 3
      %p62 = por %p60, %p61
      %p63 = scmp.ne.s32.totalorder %s52, %s53
      %p64 = scmp.eq.s32.totalorder %s14, 0
      %p65 = por %p63, %p64
      %p66 = scmp.ne.s32.totalorder %s52, %s53
      %p67 = scmp.eq.s32.totalorder %s15, 3
      %p68 = por %p66, %p67
      %p70 = scmp.ne.s32.totalorder %s53, %s69
      %p71 = scmp.eq.s32.totalorder %s15, 0
      %p72 = por %p70, %p71
      %p73 = scmp.le.s32.totalorder 1, %s9
      %p74 = scmp.lt.s32.totalorder %s9, 5
      %p75 = pnand %p73, %p74
      %p76 = pneg %p75
      // Predicated region
      $region9: #{custom-call.11} parent=5 // pred_check
        _
      $region10: #{custom-call.11} parent=5 // pred_check_branch
        %78 = sbr.rel (%p75) target = $region12
      $region11: #{custom-call.11} parent=5 // pred_region
        %s79 = ssub.s32 %s9, 1
      $region12: #{custom-call.11} parent=5 // pred_fallthru
        _
      %p80 = scmp.lt.s32.totalorder %s9, 4
      // Predicated region
      $region13: #{custom-call.11} parent=5 // pred_check
        %p81 = pneg %p80
      $region14: #{custom-call.11} parent=5 // pred_check_branch
        %83 = sbr.rel (%p81) target = $region16
      $region15: #{custom-call.11} parent=5 // pred_region
        %s84 = sand.u32 %s9, 1
        %s85 = sand.u32 %s9, 1
        %s86 = smul.addr %s85, 4
        %s87 = scalar_lea.vmem [#allocation1], %s86
        %s88 = smul.addr %s9, 4
        %s89 = scalar_lea.vmem %s0, %s88
        // Predicated region
        $region17: #{custom-call.11} parent=15 // pred_check
          _
        $region18: #{custom-call.11} parent=15 // pred_check_branch
          %91 = sbr.rel (0) target = $region20
        $region19: #{custom-call.11} parent=15 // pred_region
          // Predicated region
          $region21: #{custom-call.11} parent=19 // pred_check
            _
          $region22: #{custom-call.11} parent=19 // pred_check_branch
            %93 = sbr.rel target = $region24
          $region23: #{custom-call.11} parent=19 // pred_region
            // Predicated region
            $region36: #{custom-call.11} parent=23 // pred_check
              _
            $region37: #{custom-call.11} parent=23 // pred_check_branch
              %108 = sbr.rel (0) target = $region39
            $region38: #{custom-call.11} parent=23 // pred_region
              loop: start=0, step=1, limit=1
              $region40: #{custom-call.11} parent=38 // loop_pre_header
                _
              $region41: #{custom-call.11} parent=38 // loop_header
                %s111 = sphi 0, %s115
                %p112 = scmp.ge.s32.totalorder %s111, 1
                %s116 = sphi %s89, %s89
                %s117 = sphi %s87, %s87
              $region42: #{custom-call.11} parent=38 // loop_header_branch
                %114 = sbr.rel (%p112) target = $region46
              $region43: #{custom-call.11} parent=38 // loop_body
                %v118 = vld [vmem:[%s116] sm:$0xf]
                %119 = vst [vmem:[%s117] sm:$0xf] %v118
              $region44: #{custom-call.11} parent=38 // loop_footer
                %s115 = sadd.s32 1, %s111
              $region45: #{custom-call.11} parent=38 // loop_footer_branch
                %110 = sbr.rel target = $region41
              $region46: #{custom-call.11} parent=38 // loop_exit
                _
            $region39: #{custom-call.11} parent=23 // pred_fallthru
              _
          $region24: #{custom-call.11} parent=19 // pred_fallthru
            _
          // Predicated region
          $region25: #{custom-call.11} parent=19 // pred_check
            _
          $region26: #{custom-call.11} parent=19 // pred_check_branch
            %95 = sbr.rel (0) target = $region28
          $region27: #{custom-call.11} parent=19 // pred_region
            loop: start=0, step=1, limit=1
            $region29: #{custom-call.11} parent=27 // loop_pre_header
              _
            $region30: #{custom-call.11} parent=27 // loop_header
              %s98 = sphi 0, %s102
              %p99 = scmp.ge.s32.totalorder %s98, 1
              %s103 = sphi %s89, %s89
              %s104 = sphi %s87, %s87
            $region31: #{custom-call.11} parent=27 // loop_header_branch
              %101 = sbr.rel (%p99) target = $region35
            $region32: #{custom-call.11} parent=27 // loop_body
              %v105 = vld [vmem:[%s103] sm:$0xf]
              %106 = vst [vmem:[%s104] sm:$0xf] %v105
            $region33: #{custom-call.11} parent=27 // loop_footer
              %s102 = sadd.s32 1, %s98
            $region34: #{custom-call.11} parent=27 // loop_footer_branch
              %97 = sbr.rel target = $region30
            $region35: #{custom-call.11} parent=27 // loop_exit
              _
          $region28: #{custom-call.11} parent=19 // pred_fallthru
            _
        $region20: #{custom-call.11} parent=15 // pred_fallthru
          _
        %120 = vnop
      $region16: #{custom-call.11} parent=5 // pred_fallthru
        _
      %p121 = scmp.le.s32.totalorder 1, %s9
      %p122 = scmp.lt.s32.totalorder %s9, 5
      %p123 = pnand %p121, %p122
      %p124 = pneg %p123
      // Predicated region
      $region47: #{custom-call.11} parent=5 // pred_check
        _
      $region48: #{custom-call.11} parent=5 // pred_check_branch
        %126 = sbr.rel (%p123) target = $region50
      $region49: #{custom-call.11} parent=5 // pred_region
        #allocation9 [shape = 's32[4,128]{1,0}', space=vmem, size = 0x1000, scoped, tag = 'scratch for permutations']
        %s127 = ssub.s32 %s9, 1
        %s128 = sand.u32 %s14, 1
        %s129 = sand.u32 %s14, 1
        %s130 = smul.addr %s129, 4
        %s131 = scalar_lea.vmem [#allocation1], %s130
        %s132 = sand.u32 %s14, 1
        %s133 = sand.u32 %s14, 1
        %s134 = smul.addr %s133, 4
        %s135 = scalar_lea.vmem [#allocation1], %s134
        %s136 = sand.u32 %s14, 1
        %s137 = sand.u32 %s14, 1
        %s138 = smul.addr %s137, 4
        %s139 = scalar_lea.vmem [#allocation3], %s138
        %p140 = pneg %p37
        %p141 = pneg %p34
        %s142 = sand.u32 %s24, 1
        %s143 = scalar_lea.sflag [#allocation6], %s142
        %s144 = sand.u32 %s24, 1
        %s145 = smul.addr %s144, 4
        %s146 = scalar_lea.vmem [#allocation5], %s145
        %p147 = pneg %p65
        %p148 = pneg %p62
        %s149 = sand.u32 %s52, 1
        %s150 = sand.u32 %s52, 1
        %s151 = smul.addr %s150, 4
        %s152 = scalar_lea.vmem [#allocation8], %s151
        %s154 = sshllo.u32 0, 4
        %v155 = vld [vmem:[%s135] sm:%s154]
        %156 = vst [vmem:[#allocation0] sm:%s154] %v155
        %s157 = sshrl.u32 %s14, 3
        %s158 = sshrl.u32 %s14, 3
        %v159 = vld [vmem:[#allocation0] sm:$0xff]
        %160 = vst [vmem:[#allocation2] sm:$0xff] %v159
        %s161 = sand.u32 %s14, 7
        %s162 = scalar_lea.vmem [#allocation4], %s161
        %s163 = sand.u32 %s14, 7
        %s164 = scalar_lea.vmem [#allocation7], %s163
        %165 = vst [vmem:[%s162] sm:$0x1] 0
        %v166 = vlaneseq
        %v167 = vshrl.u32 %v166, 7
        %v168 = vmov %v167
        %170 = vst [vmem:[#allocation9] sm:$0xff] %v168
        loop: start=0, step=1, limit=4
        $region52: #{custom-call.11} parent=49 // loop_pre_header
          _
        $region53: #{custom-call.11} parent=49 // loop_header
          %s172 = sphi 0, %s176
          %p173 = scmp.ge.s32.totalorder %s172, 4
        $region54: #{custom-call.11} parent=49 // loop_header_branch
          %175 = sbr.rel (%p173) target = $region58
        $region55: #{custom-call.11} parent=49 // loop_body
          %v177 = vstv %s172
          %v178 = vlaneseq
          %v179 = vshrl.u32 %v178, 7
          %v180 = vmov %v179
          %v181 = vld [vmem:[#allocation2] sm:$0xff]
          %v182 = vand.u32 2147483647, %v181
          %v184 = vstv %s172
          %vm185 = vcmp.ge.s32.totalorder %v180, %v184
          %vm186 = vcmp.lt.s32.totalorder %v180, 4
          %vm187 = vmand %vm185, %vm186
          %vm188 = vcmp.lt.f32.partialorder -inf, %v182
          %vm189 = vmand %vm187, %vm188
          %v190 = vsel %vm189, %v180, %v177
          %v191 = vsel %vm189, %v182, -inf
          %v192 = vrot.slane %v191, 1
          %v193 = vrot.slane %v190, 1
          %vm194 = vcmp.ge.f32.partialorder %v192, %v191
          %v195 = vsel %vm194, %v192, %v191
          %v196 = vsel %vm194, %v193, %v190
          %v197 = vrot.slane %v192, 1
          %v198 = vrot.slane %v193, 1
          %vm199 = vcmp.ge.f32.partialorder %v197, %v195
          %v200 = vsel %vm199, %v197, %v195
          %v201 = vsel %vm199, %v198, %v196
          %v202 = vrot.slane %v197, 1
          %v203 = vrot.slane %v198, 1
          %vm204 = vcmp.ge.f32.partialorder %v202, %v200
          %v205 = vsel %vm204, %v202, %v200
          %v206 = vsel %vm204, %v203, %v201
          %v207 = vrot.slane %v202, 1
          %v208 = vrot.slane %v203, 1
          %vm209 = vcmp.ge.f32.partialorder %v207, %v205
          %v210 = vsel %vm209, %v207, %v205
          %v211 = vsel %vm209, %v208, %v206
          %v212 = vrot.slane %v207, 1
          %v213 = vrot.slane %v208, 1
          %vm214 = vcmp.ge.f32.partialorder %v212, %v210
          %v215 = vsel %vm214, %v212, %v210
          %v216 = vsel %vm214, %v213, %v211
          %v217 = vrot.slane %v212, 1
          %v218 = vrot.slane %v213, 1
          %vm219 = vcmp.ge.f32.partialorder %v217, %v215
          %v220 = vsel %vm219, %v217, %v215
          %v221 = vsel %vm219, %v218, %v216
          %v222 = vrot.slane %v217, 1
          %v223 = vrot.slane %v218, 1
          %vm224 = vcmp.ge.f32.partialorder %v222, %v220
          %v225 = vsel %vm224, %v222, %v220
          %v226 = vsel %vm224, %v223, %v221
          %s227 = ssub.s32 128, %s172
          %228 = vrot.lane.b32.xlu0 %v226, %s227
          %v229 = vpop.permute.xlu0 %228
          %s230 = vtos %v229
          %v231 = vstv %s172
          %v232 = vlaneseq
          %v233 = vand.u32 %v232, 127
          %vm234 = vcmp.eq.s32.totalorder %v233, %v231
          %v235 = vstv %s230
          %v236 = vld [vmem:[%s162] ss:$0 sm:$0xff]
          %v237 = vsel %vm234, %v235, %v236
          %238 = vst [vmem:[%s162] sm:$0x1] %v237
          %s239 = scalar_lea.vmem [#allocation2], %s172
          %s240 = scalar_lea.vmem [#allocation2], %s230
          %v241 = vld [vmem:[%s239] ss:$0 sm:$0xff]
          %v242 = vld [vmem:[%s240] ss:$0 sm:$0xff]
          %243 = vst [vmem:[%s240] sm:$0x1] %v241
          %244 = vst [vmem:[%s239] sm:$0x1] %v242
          %s245 = scalar_lea.vmem [#allocation9], %s172
          %s246 = scalar_lea.vmem [#allocation9], %s230
          %v247 = vld [vmem:[%s245] ss:$0 sm:$0xff]
          %v248 = vld [vmem:[%s246] ss:$0 sm:$0xff]
          %249 = vst [vmem:[%s246] sm:$0x1] %v247
          %250 = vst [vmem:[%s245] sm:$0x1] %v248
          %vm251 = vcmp.ne.f32.partialorder %v242, 0.0
          %vm252 = vmand %vm234, %vm251
          %v253 = vsel %vm252, %v242, 1.0
          %v254 = vlaneseq
          %v255 = vand.u32 %v254, 127
          %v256 = vstv %s172
          %vm257 = vcmp.gt.s32.totalorder %v255, %v256
          %v258 = vsel %vm257, %v242, 0.0
          %v259 = vlaneseq
          %v260 = vshrl.u32 %v259, 7
          %v261 = vmov %v260
          %v262 = vld [vmem:[#allocation2] sm:$0xff]
          %v264 = vstv %s172
          %vm265 = vcmp.gt.s32.totalorder %v261, %v264
          %v266 = vsel %vm265, %v253, 1.0
          %v267 = vrcp.pop %v266
          %v268 = vmul.f32 %v262, %v267
          %vm269 = vmand %vm265, %vm234
          %v270 = vsel %vm269, %v268, 0.0
          %271 = vadd.xlane.f32.xlu0 %v270
          %v272 = vpop.xlane.xlu0 %271
          %v273 = vmul.f32 %v272, %v258
          %v274 = vsub.f32 %v268, %v273
          %275 = vst [vmem:[#allocation2] sm:$0xff] %v274
        $region56: #{custom-call.11} parent=49 // loop_footer
          %s176 = sadd.s32 1, %s172
        $region57: #{custom-call.11} parent=49 // loop_footer_branch
          %171 = sbr.rel target = $region53
        $region58: #{custom-call.11} parent=49 // loop_exit
          _
        %v276 = vld [vmem:[#allocation9] sm:$0xff]
        %s277 = scalar_lea.vmem [#allocation9], 8
        %s278 = scalar_lea.vmem [#allocation9], 16
        %s279 = scalar_lea.vmem [#allocation9], 24
        %s280 = scalar_lea.vmem [#allocation9], 32
        %s281 = scalar_lea.vmem [#allocation9], 40
        %s282 = scalar_lea.vmem [#allocation9], 48
        %s283 = scalar_lea.vmem [#allocation9], 56
        %s284 = scalar_lea.vmem [#allocation9], 64
        %s285 = scalar_lea.vmem [#allocation9], 72
        %s286 = scalar_lea.vmem [#allocation9], 80
        %s287 = scalar_lea.vmem [#allocation9], 88
        %s288 = scalar_lea.vmem [#allocation9], 96
        %s289 = scalar_lea.vmem [#allocation9], 104
        %s290 = scalar_lea.vmem [#allocation9], 112
        %s291 = scalar_lea.vmem [#allocation9], 120
        %292 = vxpose.xlu0.b32.start [1/16] %v276, 128
        %293 = vxpose.xlu0.b32.cont [2/16] 0, 128
        %294 = vxpose.xlu0.b32.cont [3/16] 0, 128
        %295 = vxpose.xlu0.b32.cont [4/16] 0, 128
        %296 = vxpose.xlu0.b32.cont [5/16] 0, 128
        %297 = vxpose.xlu0.b32.cont [6/16] 0, 128
        %298 = vxpose.xlu0.b32.cont [7/16] 0, 128
        %299 = vxpose.xlu0.b32.cont [8/16] 0, 128
        %300 = vxpose.xlu0.b32.cont [9/16] 0, 128
        %301 = vxpose.xlu0.b32.cont [10/16] 0, 128
        %302 = vxpose.xlu0.b32.cont [11/16] 0, 128
        %303 = vxpose.xlu0.b32.cont [12/16] 0, 128
        %304 = vxpose.xlu0.b32.cont [13/16] 0, 128
        %305 = vxpose.xlu0.b32.cont [14/16] 0, 128
        %306 = vxpose.xlu0.b32.cont [15/16] 0, 128
        %307 = vxpose.xlu0.b32.end [16/16] 0, 128
        %v308 = vpop.trf.xlu0
        %v309 = vpop.trf.xlu0
        %v310 = vpop.trf.xlu0
        %v311 = vpop.trf.xlu0
        %v312 = vpop.trf.xlu0
        %v313 = vpop.trf.xlu0
        %v314 = vpop.trf.xlu0
        %v315 = vpop.trf.xlu0
        %v316 = vpop.trf.xlu0
        %v317 = vpop.trf.xlu0
        %v318 = vpop.trf.xlu0
        %v319 = vpop.trf.xlu0
        %v320 = vpop.trf.xlu0
        %v321 = vpop.trf.xlu0
        %v322 = vpop.trf.xlu0
        %v323 = vpop.trf.xlu0
        %324 = vst [vmem:[%s164] sm:$0x1] %v308
        %s326 = sshllo.u32 0, 4
        %v328 = vld [vmem:[#allocation2] sm:%s326]
        %s329 = sshllo.u32 0, 4
        %330 = vst [vmem:[%s139] sm:%s329] %v328
        %s332 = sshllo.u32 0, 4
        %v334 = vld [vmem:[#allocation4] sm:%s332]
        %s335 = sshllo.u32 0, 4
        %336 = vst [vmem:[%s146] sm:%s335] %v334
        %s338 = sshllo.u32 0, 4
        %v340 = vld [vmem:[#allocation7] sm:%s338]
        %s341 = sshllo.u32 0, 4
        %342 = vst [vmem:[%s152] sm:%s341] %v340
        %s343 = sand.u32 %s14, 1
        %s344 = sand.u32 %s14, 1
        %s345 = smul.addr %s344, 4
        %s346 = scalar_lea.vmem [#allocation3], %s345
        %s347 = sand.u32 %s24, 1
        %s348 = scalar_lea.sflag [#allocation6], %s347
        %s349 = sand.u32 %s24, 1
        %s350 = smul.addr %s349, 4
        %s351 = scalar_lea.vmem [#allocation5], %s350
        %s352 = sand.u32 %s52, 1
        %s353 = sand.u32 %s52, 1
        %s354 = smul.addr %s353, 4
        %s355 = scalar_lea.vmem [#allocation8], %s354
        %s356 = smul.addr %s14, 4
        %s357 = scalar_lea.vmem %s1, %s356
        // Predicated region
        $region59: #{custom-call.11} parent=49 // pred_check
          _
        $region60: #{custom-call.11} parent=49 // pred_check_branch
          %359 = sbr.rel (0) target = $region62
        $region61: #{custom-call.11} parent=49 // pred_region
          // Predicated region
          $region63: #{custom-call.11} parent=61 // pred_check
            _
          $region64: #{custom-call.11} parent=61 // pred_check_branch
            %361 = sbr.rel target = $region66
          $region65: #{custom-call.11} parent=61 // pred_region
            // Predicated region
            $region78: #{custom-call.11} parent=65 // pred_check
              _
            $region79: #{custom-call.11} parent=65 // pred_check_branch
              %376 = sbr.rel (0) target = $region81
            $region80: #{custom-call.11} parent=65 // pred_region
              loop: start=0, step=1, limit=1
              $region82: #{custom-call.11} parent=80 // loop_pre_header
                _
              $region83: #{custom-call.11} parent=80 // loop_header
                %s379 = sphi 0, %s383
                %p380 = scmp.ge.s32.totalorder %s379, 1
                %s384 = sphi %s346, %s346
                %s385 = sphi %s357, %s357
              $region84: #{custom-call.11} parent=80 // loop_header_branch
                %382 = sbr.rel (%p380) target = $region88
              $region85: #{custom-call.11} parent=80 // loop_body
                %v386 = vld [vmem:[%s384] sm:$0xf]
                %387 = vst [vmem:[%s385] sm:$0xf] %v386
              $region86: #{custom-call.11} parent=80 // loop_footer
                %s383 = sadd.s32 1, %s379
              $region87: #{custom-call.11} parent=80 // loop_footer_branch
                %378 = sbr.rel target = $region83
              $region88: #{custom-call.11} parent=80 // loop_exit
                _
            $region81: #{custom-call.11} parent=65 // pred_fallthru
              _
          $region66: #{custom-call.11} parent=61 // pred_fallthru
            _
          // Predicated region
          $region67: #{custom-call.11} parent=61 // pred_check
            _
          $region68: #{custom-call.11} parent=61 // pred_check_branch
            %363 = sbr.rel (0) target = $region70
          $region69: #{custom-call.11} parent=61 // pred_region
            loop: start=0, step=1, limit=1
            $region71: #{custom-call.11} parent=69 // loop_pre_header
              _
            $region72: #{custom-call.11} parent=69 // loop_header
              %s366 = sphi 0, %s370
              %p367 = scmp.ge.s32.totalorder %s366, 1
              %s371 = sphi %s346, %s346
              %s372 = sphi %s357, %s357
            $region73: #{custom-call.11} parent=69 // loop_header_branch
              %369 = sbr.rel (%p367) target = $region77
            $region74: #{custom-call.11} parent=69 // loop_body
              %v373 = vld [vmem:[%s371] sm:$0xf]
              %374 = vst [vmem:[%s372] sm:$0xf] %v373
            $region75: #{custom-call.11} parent=69 // loop_footer
              %s370 = sadd.s32 1, %s366
            $region76: #{custom-call.11} parent=69 // loop_footer_branch
              %365 = sbr.rel target = $region72
            $region77: #{custom-call.11} parent=69 // loop_exit
              _
          $region70: #{custom-call.11} parent=61 // pred_fallthru
            _
        $region62: #{custom-call.11} parent=49 // pred_fallthru
          _
        %388 = vnop
        // Predicated region
        $region89: #{custom-call.11} parent=49 // pred_check
          %p389 = pneg %p34
        $region90: #{custom-call.11} parent=49 // pred_check_branch
          %391 = sbr.rel (%p389) target = $region92
        $region91: #{custom-call.11} parent=49 // pred_region
          %s392 = sshrl.u32 %s14, 3
          %s394 = ssub.s32 64, 64
          %395 = vsyncadd %s348, %s394
          %s396 = smul.addr %s392, 64
          %s397 = scalar_lea.hbm %s2, %s396
          %s399 = sshll.u32 %s351, 4
          %s400 = int_to_ptr.vmem [resolvable:$true] %s399
          %402 = dma.vmem_to_hbm [thread:$0]  %s400, 64, %s397, %s348
        $region92: #{custom-call.11} parent=49 // pred_fallthru
          _
        // Predicated region
        $region93: #{custom-call.11} parent=49 // pred_check
          %p403 = pneg %p62
        $region94: #{custom-call.11} parent=49 // pred_check_branch
          %405 = sbr.rel (%p403) target = $region96
        $region95: #{custom-call.11} parent=49 // pred_region
          %s406 = sshrl.u32 %s14, 3
          %s407 = smul.addr %s406, 4
          %s408 = scalar_lea.vmem %s3, %s407
          // Predicated region
          $region97: #{custom-call.11} parent=95 // pred_check
            _
          $region98: #{custom-call.11} parent=95 // pred_check_branch
            %410 = sbr.rel (0) target = $region100
          $region99: #{custom-call.11} parent=95 // pred_region
            // Predicated region
            $region101: #{custom-call.11} parent=99 // pred_check
              _
            $region102: #{custom-call.11} parent=99 // pred_check_branch
              %412 = sbr.rel target = $region104
            $region103: #{custom-call.11} parent=99 // pred_region
              // Predicated region
              $region116: #{custom-call.11} parent=103 // pred_check
                _
              $region117: #{custom-call.11} parent=103 // pred_check_branch
                %427 = sbr.rel (0) target = $region119
              $region118: #{custom-call.11} parent=103 // pred_region
                loop: start=0, step=1, limit=1
                $region120: #{custom-call.11} parent=118 // loop_pre_header
                  _
                $region121: #{custom-call.11} parent=118 // loop_header
                  %s430 = sphi 0, %s434
                  %p431 = scmp.ge.s32.totalorder %s430, 1
                  %s435 = sphi %s355, %s355
                  %s436 = sphi %s408, %s408
                $region122: #{custom-call.11} parent=118 // loop_header_branch
                  %433 = sbr.rel (%p431) target = $region126
                $region123: #{custom-call.11} parent=118 // loop_body
                  %v437 = vld [vmem:[%s435] sm:$0xf]
                  %438 = vst [vmem:[%s436] sm:$0xf] %v437
                $region124: #{custom-call.11} parent=118 // loop_footer
                  %s434 = sadd.s32 1, %s430
                $region125: #{custom-call.11} parent=118 // loop_footer_branch
                  %429 = sbr.rel target = $region121
                $region126: #{custom-call.11} parent=118 // loop_exit
                  _
              $region119: #{custom-call.11} parent=103 // pred_fallthru
                _
            $region104: #{custom-call.11} parent=99 // pred_fallthru
              _
            // Predicated region
            $region105: #{custom-call.11} parent=99 // pred_check
              _
            $region106: #{custom-call.11} parent=99 // pred_check_branch
              %414 = sbr.rel (0) target = $region108
            $region107: #{custom-call.11} parent=99 // pred_region
              loop: start=0, step=1, limit=1
              $region109: #{custom-call.11} parent=107 // loop_pre_header
                _
              $region110: #{custom-call.11} parent=107 // loop_header
                %s417 = sphi 0, %s421
                %p418 = scmp.ge.s32.totalorder %s417, 1
                %s422 = sphi %s355, %s355
                %s423 = sphi %s408, %s408
              $region111: #{custom-call.11} parent=107 // loop_header_branch
                %420 = sbr.rel (%p418) target = $region115
              $region112: #{custom-call.11} parent=107 // loop_body
                %v424 = vld [vmem:[%s422] sm:$0xf]
                %425 = vst [vmem:[%s423] sm:$0xf] %v424
              $region113: #{custom-call.11} parent=107 // loop_footer
                %s421 = sadd.s32 1, %s417
              $region114: #{custom-call.11} parent=107 // loop_footer_branch
                %416 = sbr.rel target = $region110
              $region115: #{custom-call.11} parent=107 // loop_exit
                _
            $region108: #{custom-call.11} parent=99 // pred_fallthru
              _
          $region100: #{custom-call.11} parent=95 // pred_fallthru
            _
          %439 = vnop
        $region96: #{custom-call.11} parent=49 // pred_fallthru
          _
      $region50: #{custom-call.11} parent=5 // pred_fallthru
        _
      %p440 = scmp.le.s32.totalorder 2, %s9
      // Predicated region
      $region127: #{custom-call.11} parent=5 // pred_check
        %p441 = pneg %p440
      $region128: #{custom-call.11} parent=5 // pred_check_branch
        %443 = sbr.rel (%p441) target = $region130
      $region129: #{custom-call.11} parent=5 // pred_region
        %s444 = ssub.s32 %s9, 2
        %s445 = sand.u32 %s15, 1
        %s446 = sand.u32 %s15, 1
        %s447 = smul.addr %s446, 4
        %s448 = scalar_lea.vmem [#allocation3], %s447
        // Predicated region
        $region131: #{custom-call.11} parent=129 // pred_check
          %p449 = pneg %p40
        $region132: #{custom-call.11} parent=129 // pred_check_branch
          %451 = sbr.rel (%p449) target = $region134
        $region133: #{custom-call.11} parent=129 // pred_region
          %s452 = sand.u32 %s25, 1
          %s453 = scalar_lea.sflag [#allocation6], %s452
          %s454 = sand.u32 %s25, 1
          %s455 = smul.addr %s454, 4
          %s456 = scalar_lea.vmem [#allocation5], %s455
          %457 = dma.done %s453, 64
        $region134: #{custom-call.11} parent=129 // pred_fallthru
          _
        // Predicated region
        $region135: #{custom-call.11} parent=129 // pred_check
          %p458 = pneg %p68
        $region136: #{custom-call.11} parent=129 // pred_check_branch
          %460 = sbr.rel (%p458) target = $region138
        $region137: #{custom-call.11} parent=129 // pred_region
          %s461 = sand.u32 %s53, 1
          %s462 = sand.u32 %s53, 1
          %s463 = smul.addr %s462, 4
          %s464 = scalar_lea.vmem [#allocation8], %s463
        $region138: #{custom-call.11} parent=129 // pred_fallthru
          _
      $region130: #{custom-call.11} parent=5 // pred_fallthru
        _
    $region6: #{custom-call.11} parent=1 // loop_footer
      %s13 = sadd.s32 1, %s9
    $region7: #{custom-call.11} parent=1 // loop_footer_branch
      %8 = sbr.rel target = $region3
    $region8: #{custom-call.11} parent=1 // loop_exit
      _
    %465 = vsyncpa [#allocation6], 1
    %s466 = scalar_lea.sflag [#allocation6], 1
    %467 = vsyncpa %s466, 1

// kernel: custom-call.12
$region0: #{custom-call.12}
  %s0 = inlined_call_operand.vmem [shape: f32[4,1,4,4], index: 0, kind: input, shape index: {}]
  %s1 = inlined_call_operand.vmem [shape: f32[4,1,4,4], index: 1, kind: output, shape index: {}]
  $region1: #{custom-call.12} parent=0
    #allocation0 [shape = 'u8[4096]{0}', space=vmem, size = 0x1000, scoped, tag = 'operand span for operand 0']
    #allocation1 [shape = 'u8[4096]{0}', space=vmem, size = 0x1000, scoped, tag = 'packed  for operand 0']
    #allocation2 [shape = 'u8[4096]{0}', space=vmem, size = 0x1000, scoped, tag = 'operand span for operand 1']
    #allocation3 [shape = 'u8[4096]{0}', space=vmem, size = 0x1000, scoped, tag = 'packed  for operand 1']
    loop: start=0, step=1, limit=6
    $region2: #{custom-call.12} parent=1 // loop_pre_header
      _
    $region3: #{custom-call.12} parent=1 // loop_header
      %s3 = sphi 0, %s7
      %p4 = scmp.ge.s32.totalorder %s3, 6
      %s10 = sphi 0, %s36
      %s11 = sphi 0, %s32
      %s12 = sphi 0, %s28
      %s13 = sphi 0, %s24
      %s14 = sphi 0, %s10
      %s15 = sphi 0, %s11
      %s16 = sphi 0, %s12
      %s17 = sphi 0, %s13
      %s18 = sphi 0, %s14
      %s19 = sphi 0, %s15
      %s20 = sphi 0, %s16
      %s21 = sphi 0, %s17
    $region4: #{custom-call.12} parent=1 // loop_header_branch
      %6 = sbr.rel (%p4) target = $region8
    $region5: #{custom-call.12} parent=1 // loop_body
      %s8 = ssub.s32 %s3, 1
      %s9 = ssub.s32 %s3, 2
      %s22 = sadd.s32 1, %s13
      %p23 = scmp.ge.s32.totalorder %s22, 1
      %s24 = scalar_select %p23, 0, %s22
      %s25 = sadd.s32 1, %s12
      %s26 = scalar_select %p23, %s25, %s12
      %p27 = scmp.ge.s32.totalorder %s26, 1
      %s28 = scalar_select %p27, 0, %s26
      %s29 = sadd.s32 1, %s11
      %s30 = scalar_select %p27, %s29, %s11
      %p31 = scmp.ge.s32.totalorder %s30, 1
      %s32 = scalar_select %p31, 0, %s30
      %s33 = sadd.s32 1, %s10
      %s34 = scalar_select %p31, %s33, %s10
      %p35 = scmp.ge.s32.totalorder %s34, 4
      %s36 = scalar_select %p35, 0, %s34
      %p37 = scmp.le.s32.totalorder 1, %s3
      %p38 = scmp.lt.s32.totalorder %s3, 5
      %p39 = pnand %p37, %p38
      %p40 = pneg %p39
      // Predicated region
      $region9: #{custom-call.12} parent=5 // pred_check
        _
      $region10: #{custom-call.12} parent=5 // pred_check_branch
        %42 = sbr.rel (%p39) target = $region12
      $region11: #{custom-call.12} parent=5 // pred_region
        %s43 = ssub.s32 %s3, 1
      $region12: #{custom-call.12} parent=5 // pred_fallthru
        _
      %p44 = scmp.lt.s32.totalorder %s3, 4
      // Predicated region
      $region13: #{custom-call.12} parent=5 // pred_check
        %p45 = pneg %p44
      $region14: #{custom-call.12} parent=5 // pred_check_branch
        %47 = sbr.rel (%p45) target = $region16
      $region15: #{custom-call.12} parent=5 // pred_region
        %s48 = sand.u32 %s3, 1
        %s49 = sand.u32 %s3, 1
        %s50 = smul.addr %s49, 4
        %s51 = scalar_lea.vmem [#allocation1], %s50
        %s52 = sadd.s32 %s13, %s12
        %s53 = sadd.s32 %s52, %s11
        %s54 = sadd.s32 %s53, %s10
        %s55 = smul.addr %s54, 4
        %s56 = scalar_lea.vmem %s0, %s55
        // Predicated region
        $region17: #{custom-call.12} parent=15 // pred_check
          _
        $region18: #{custom-call.12} parent=15 // pred_check_branch
          %58 = sbr.rel (0) target = $region20
        $region19: #{custom-call.12} parent=15 // pred_region
          // Predicated region
          $region21: #{custom-call.12} parent=19 // pred_check
            _
          $region22: #{custom-call.12} parent=19 // pred_check_branch
            %60 = sbr.rel target = $region24
          $region23: #{custom-call.12} parent=19 // pred_region
            // Predicated region
            $region36: #{custom-call.12} parent=23 // pred_check
              _
            $region37: #{custom-call.12} parent=23 // pred_check_branch
              %75 = sbr.rel (0) target = $region39
            $region38: #{custom-call.12} parent=23 // pred_region
              loop: start=0, step=1, limit=1
              $region40: #{custom-call.12} parent=38 // loop_pre_header
                _
              $region41: #{custom-call.12} parent=38 // loop_header
                %s78 = sphi 0, %s82
                %p79 = scmp.ge.s32.totalorder %s78, 1
                %s83 = sphi %s56, %s56
                %s84 = sphi %s51, %s51
              $region42: #{custom-call.12} parent=38 // loop_header_branch
                %81 = sbr.rel (%p79) target = $region46
              $region43: #{custom-call.12} parent=38 // loop_body
                %v85 = vld [vmem:[%s83] sm:$0xf]
                %86 = vst [vmem:[%s84] sm:$0xf] %v85
              $region44: #{custom-call.12} parent=38 // loop_footer
                %s82 = sadd.s32 1, %s78
              $region45: #{custom-call.12} parent=38 // loop_footer_branch
                %77 = sbr.rel target = $region41
              $region46: #{custom-call.12} parent=38 // loop_exit
                _
            $region39: #{custom-call.12} parent=23 // pred_fallthru
              _
          $region24: #{custom-call.12} parent=19 // pred_fallthru
            _
          // Predicated region
          $region25: #{custom-call.12} parent=19 // pred_check
            _
          $region26: #{custom-call.12} parent=19 // pred_check_branch
            %62 = sbr.rel (0) target = $region28
          $region27: #{custom-call.12} parent=19 // pred_region
            loop: start=0, step=1, limit=1
            $region29: #{custom-call.12} parent=27 // loop_pre_header
              _
            $region30: #{custom-call.12} parent=27 // loop_header
              %s65 = sphi 0, %s69
              %p66 = scmp.ge.s32.totalorder %s65, 1
              %s70 = sphi %s56, %s56
              %s71 = sphi %s51, %s51
            $region31: #{custom-call.12} parent=27 // loop_header_branch
              %68 = sbr.rel (%p66) target = $region35
            $region32: #{custom-call.12} parent=27 // loop_body
              %v72 = vld [vmem:[%s70] sm:$0xf]
              %73 = vst [vmem:[%s71] sm:$0xf] %v72
            $region33: #{custom-call.12} parent=27 // loop_footer
              %s69 = sadd.s32 1, %s65
            $region34: #{custom-call.12} parent=27 // loop_footer_branch
              %64 = sbr.rel target = $region30
            $region35: #{custom-call.12} parent=27 // loop_exit
              _
          $region28: #{custom-call.12} parent=19 // pred_fallthru
            _
        $region20: #{custom-call.12} parent=15 // pred_fallthru
          _
        %87 = vnop
      $region16: #{custom-call.12} parent=5 // pred_fallthru
        _
      %p88 = scmp.le.s32.totalorder 1, %s3
      %p89 = scmp.lt.s32.totalorder %s3, 5
      %p90 = pnand %p88, %p89
      %p91 = pneg %p90
      // Predicated region
      $region47: #{custom-call.12} parent=5 // pred_check
        _
      $region48: #{custom-call.12} parent=5 // pred_check_branch
        %93 = sbr.rel (%p90) target = $region50
      $region49: #{custom-call.12} parent=5 // pred_region
        #allocation4 [shape = 'f32[4,4]{1,0}', space=vmem, size = 0x1000, scoped, tag = 'rescaled input a']
        %s94 = ssub.s32 %s3, 1
        %s95 = sand.u32 %s8, 1
        %s96 = sand.u32 %s8, 1
        %s97 = smul.addr %s96, 4
        %s98 = scalar_lea.vmem [#allocation1], %s97
        %s99 = sand.u32 %s8, 1
        %s100 = sand.u32 %s8, 1
        %s101 = smul.addr %s100, 4
        %s102 = scalar_lea.vmem [#allocation1], %s101
        %s103 = sand.u32 %s8, 1
        %s104 = sand.u32 %s8, 1
        %s105 = smul.addr %s104, 4
        %s106 = scalar_lea.vmem [#allocation3], %s105
        %s108 = sshllo.u32 0, 4
        %v109 = vld [vmem:[%s102] sm:%s108]
        %110 = vst [vmem:[#allocation0] sm:%s108] %v109
        %v111 = vlaneseq
        %v112 = vand.u32 %v111, 127
        %vm113 = vcmp.lt.s32.totalorder %v112, 4
        %v114 = vlaneseq
        %v115 = vshrl.u32 %v114, 7
        %vm117 = vcmp.eq.s32.totalorder %v115, %v112
        %v118 = vld [vmem:[#allocation0] sm:$0xff]
        %v119 = vsel %vm117, %v118, 0.0
        %120 = vadd.xlane.f32.xlu0 %v119
        %v121 = vpop.xlane.xlu0 %120
        %vm122 = vcmp.le.s32.totalorder %v115, %v112
        %vm123 = vmand %vm122, %vm113
        %v124 = vsel %vm123, %v118, 0.0
        %v125 = vrcp.pop %v121
        %v126 = vmul.f32 %v124, %v125
        %127 = vst [vmem:[#allocation4] sm:$0xff] %v126
        %v128 = vlaneseq
        %v129 = vand.u32 %v128, 127
        %v130 = vlaneseq
        %v131 = vshrl.u32 %v130, 7
        %vm133 = vcmp.eq.s32.totalorder %v129, %v131
        %v134 = vlaneseq
        %v135 = vand.u32 %v134, 127
        %vm136 = vcmp.eq.s32.totalorder %v135, 3
        %v137 = vsel %vm136, 1.0, -1.0
        %v138 = vsel %vm133, %v137, 0.0
        %s139 = scalar_lea.vmem [#allocation4], 2
        %v140 = vld [vmem:[%s139] ss:$0 sm:$0xff]
        %v141 = vxor.u32 %v140, 2147483648
        %v142 = vlaneseq
        %v143 = vand.u32 %v142, 127
        %vm144 = vcmp.eq.s32.totalorder %v143, 2
        %v145 = vmul.f32 %v141, %v138
        %146 = vadd.xlane.f32.xlu0 %v145
        %v147 = vpop.xlane.xlu0 %146
        %v148 = vsel %vm144, %v147, %v138
        %s149 = scalar_lea.vmem [#allocation4], 1
        %v150 = vld [vmem:[%s149] ss:$0 sm:$0xff]
        %v151 = vxor.u32 %v150, 2147483648
        %v152 = vlaneseq
        %v153 = vand.u32 %v152, 127
        %vm154 = vcmp.eq.s32.totalorder %v153, 1
        %v155 = vmul.f32 %v151, %v148
        %156 = vadd.xlane.f32.xlu0 %v155
        %v157 = vpop.xlane.xlu0 %156
        %v158 = vsel %vm154, %v157, %v148
        %v159 = vld [vmem:[#allocation4] ss:$0 sm:$0xff]
        %v160 = vxor.u32 %v159, 2147483648
        %v161 = vlaneseq
        %v162 = vand.u32 %v161, 127
        %vm163 = vcmp.eq.s32.totalorder %v162, 0
        %v164 = vmul.f32 %v160, %v158
        %165 = vadd.xlane.f32.xlu0 %v164
        %v166 = vpop.xlane.xlu0 %165
        %v167 = vsel %vm163, %v166, %v158
        %v168 = vrcp.pop %v121
        %v169 = vmul.f32 %v167, %v168
        %vm170 = vweird.f32 %v121
        %v171 = vsel %vm170, %v167, %v169
        %172 = vst [vmem:[#allocation2] sm:$0xff] %v171
        %s174 = sshllo.u32 0, 4
        %v176 = vld [vmem:[#allocation2] sm:%s174]
        %s177 = sshllo.u32 0, 4
        %178 = vst [vmem:[%s106] sm:%s177] %v176
        %s179 = sand.u32 %s8, 1
        %s180 = sand.u32 %s8, 1
        %s181 = smul.addr %s180, 4
        %s182 = scalar_lea.vmem [#allocation3], %s181
        %s183 = sadd.s32 %s17, %s16
        %s184 = sadd.s32 %s183, %s15
        %s185 = sadd.s32 %s184, %s14
        %s186 = smul.addr %s185, 4
        %s187 = scalar_lea.vmem %s1, %s186
        // Predicated region
        $region51: #{custom-call.12} parent=49 // pred_check
          _
        $region52: #{custom-call.12} parent=49 // pred_check_branch
          %189 = sbr.rel (0) target = $region54
        $region53: #{custom-call.12} parent=49 // pred_region
          // Predicated region
          $region55: #{custom-call.12} parent=53 // pred_check
            _
          $region56: #{custom-call.12} parent=53 // pred_check_branch
            %191 = sbr.rel target = $region58
          $region57: #{custom-call.12} parent=53 // pred_region
            // Predicated region
            $region70: #{custom-call.12} parent=57 // pred_check
              _
            $region71: #{custom-call.12} parent=57 // pred_check_branch
              %206 = sbr.rel (0) target = $region73
            $region72: #{custom-call.12} parent=57 // pred_region
              loop: start=0, step=1, limit=1
              $region74: #{custom-call.12} parent=72 // loop_pre_header
                _
              $region75: #{custom-call.12} parent=72 // loop_header
                %s209 = sphi 0, %s213
                %p210 = scmp.ge.s32.totalorder %s209, 1
                %s214 = sphi %s182, %s182
                %s215 = sphi %s187, %s187
              $region76: #{custom-call.12} parent=72 // loop_header_branch
                %212 = sbr.rel (%p210) target = $region80
              $region77: #{custom-call.12} parent=72 // loop_body
                %v216 = vld [vmem:[%s214] sm:$0xf]
                %217 = vst [vmem:[%s215] sm:$0xf] %v216
              $region78: #{custom-call.12} parent=72 // loop_footer
                %s213 = sadd.s32 1, %s209
              $region79: #{custom-call.12} parent=72 // loop_footer_branch
                %208 = sbr.rel target = $region75
              $region80: #{custom-call.12} parent=72 // loop_exit
                _
            $region73: #{custom-call.12} parent=57 // pred_fallthru
              _
          $region58: #{custom-call.12} parent=53 // pred_fallthru
            _
          // Predicated region
          $region59: #{custom-call.12} parent=53 // pred_check
            _
          $region60: #{custom-call.12} parent=53 // pred_check_branch
            %193 = sbr.rel (0) target = $region62
          $region61: #{custom-call.12} parent=53 // pred_region
            loop: start=0, step=1, limit=1
            $region63: #{custom-call.12} parent=61 // loop_pre_header
              _
            $region64: #{custom-call.12} parent=61 // loop_header
              %s196 = sphi 0, %s200
              %p197 = scmp.ge.s32.totalorder %s196, 1
              %s201 = sphi %s182, %s182
              %s202 = sphi %s187, %s187
            $region65: #{custom-call.12} parent=61 // loop_header_branch
              %199 = sbr.rel (%p197) target = $region69
            $region66: #{custom-call.12} parent=61 // loop_body
              %v203 = vld [vmem:[%s201] sm:$0xf]
              %204 = vst [vmem:[%s202] sm:$0xf] %v203
            $region67: #{custom-call.12} parent=61 // loop_footer
              %s200 = sadd.s32 1, %s196
            $region68: #{custom-call.12} parent=61 // loop_footer_branch
              %195 = sbr.rel target = $region64
            $region69: #{custom-call.12} parent=61 // loop_exit
              _
          $region62: #{custom-call.12} parent=53 // pred_fallthru
            _
        $region54: #{custom-call.12} parent=49 // pred_fallthru
          _
        %218 = vnop
      $region50: #{custom-call.12} parent=5 // pred_fallthru
        _
      %p219 = scmp.le.s32.totalorder 2, %s3
      // Predicated region
      $region81: #{custom-call.12} parent=5 // pred_check
        %p220 = pneg %p219
      $region82: #{custom-call.12} parent=5 // pred_check_branch
        %222 = sbr.rel (%p220) target = $region84
      $region83: #{custom-call.12} parent=5 // pred_region
        %s223 = ssub.s32 %s3, 2
        %s224 = sand.u32 %s9, 1
        %s225 = sand.u32 %s9, 1
        %s226 = smul.addr %s225, 4
        %s227 = scalar_lea.vmem [#allocation3], %s226
      $region84: #{custom-call.12} parent=5 // pred_fallthru
        _
    $region6: #{custom-call.12} parent=1 // loop_footer
      %s7 = sadd.s32 1, %s3
    $region7: #{custom-call.12} parent=1 // loop_footer_branch
      %2 = sbr.rel target = $region3
    $region8: #{custom-call.12} parent=1 // loop_exit
      _

// kernel: custom-call.13
$region0: #{custom-call.13}
  %s0 = inlined_call_operand.vmem [shape: f32[4,1,4,4], index: 0, kind: input, shape index: {}]
  %s1 = inlined_call_operand.vmem [shape: f32[4,1,4,4], index: 1, kind: output, shape index: {}]
  $region1: #{custom-call.13} parent=0
    #allocation0 [shape = 'u8[4096]{0}', space=vmem, size = 0x1000, scoped, tag = 'operand span for operand 0']
    #allocation1 [shape = 'u8[4096]{0}', space=vmem, size = 0x1000, scoped, tag = 'packed  for operand 0']
    #allocation2 [shape = 'u8[4096]{0}', space=vmem, size = 0x1000, scoped, tag = 'operand span for operand 1']
    #allocation3 [shape = 'u8[4096]{0}', space=vmem, size = 0x1000, scoped, tag = 'packed  for operand 1']
    loop: start=0, step=1, limit=6
    $region2: #{custom-call.13} parent=1 // loop_pre_header
      _
    $region3: #{custom-call.13} parent=1 // loop_header
      %s3 = sphi 0, %s7
      %p4 = scmp.ge.s32.totalorder %s3, 6
      %s10 = sphi 0, %s36
      %s11 = sphi 0, %s32
      %s12 = sphi 0, %s28
      %s13 = sphi 0, %s24
      %s14 = sphi 0, %s10
      %s15 = sphi 0, %s11
      %s16 = sphi 0, %s12
      %s17 = sphi 0, %s13
      %s18 = sphi 0, %s14
      %s19 = sphi 0, %s15
      %s20 = sphi 0, %s16
      %s21 = sphi 0, %s17
    $region4: #{custom-call.13} parent=1 // loop_header_branch
      %6 = sbr.rel (%p4) target = $region8
    $region5: #{custom-call.13} parent=1 // loop_body
      %s8 = ssub.s32 %s3, 1
      %s9 = ssub.s32 %s3, 2
      %s22 = sadd.s32 1, %s13
      %p23 = scmp.ge.s32.totalorder %s22, 1
      %s24 = scalar_select %p23, 0, %s22
      %s25 = sadd.s32 1, %s12
      %s26 = scalar_select %p23, %s25, %s12
      %p27 = scmp.ge.s32.totalorder %s26, 1
      %s28 = scalar_select %p27, 0, %s26
      %s29 = sadd.s32 1, %s11
      %s30 = scalar_select %p27, %s29, %s11
      %p31 = scmp.ge.s32.totalorder %s30, 1
      %s32 = scalar_select %p31, 0, %s30
      %s33 = sadd.s32 1, %s10
      %s34 = scalar_select %p31, %s33, %s10
      %p35 = scmp.ge.s32.totalorder %s34, 4
      %s36 = scalar_select %p35, 0, %s34
      %p37 = scmp.le.s32.totalorder 1, %s3
      %p38 = scmp.lt.s32.totalorder %s3, 5
      %p39 = pnand %p37, %p38
      %p40 = pneg %p39
      // Predicated region
      $region9: #{custom-call.13} parent=5 // pred_check
        _
      $region10: #{custom-call.13} parent=5 // pred_check_branch
        %42 = sbr.rel (%p39) target = $region12
      $region11: #{custom-call.13} parent=5 // pred_region
        %s43 = ssub.s32 %s3, 1
      $region12: #{custom-call.13} parent=5 // pred_fallthru
        _
      %p44 = scmp.lt.s32.totalorder %s3, 4
      // Predicated region
      $region13: #{custom-call.13} parent=5 // pred_check
        %p45 = pneg %p44
      $region14: #{custom-call.13} parent=5 // pred_check_branch
        %47 = sbr.rel (%p45) target = $region16
      $region15: #{custom-call.13} parent=5 // pred_region
        %s48 = sand.u32 %s3, 1
        %s49 = sand.u32 %s3, 1
        %s50 = smul.addr %s49, 4
        %s51 = scalar_lea.vmem [#allocation1], %s50
        %s52 = sadd.s32 %s13, %s12
        %s53 = sadd.s32 %s52, %s11
        %s54 = sadd.s32 %s53, %s10
        %s55 = smul.addr %s54, 4
        %s56 = scalar_lea.vmem %s0, %s55
        // Predicated region
        $region17: #{custom-call.13} parent=15 // pred_check
          _
        $region18: #{custom-call.13} parent=15 // pred_check_branch
          %58 = sbr.rel (0) target = $region20
        $region19: #{custom-call.13} parent=15 // pred_region
          // Predicated region
          $region21: #{custom-call.13} parent=19 // pred_check
            _
          $region22: #{custom-call.13} parent=19 // pred_check_branch
            %60 = sbr.rel target = $region24
          $region23: #{custom-call.13} parent=19 // pred_region
            // Predicated region
            $region36: #{custom-call.13} parent=23 // pred_check
              _
            $region37: #{custom-call.13} parent=23 // pred_check_branch
              %75 = sbr.rel (0) target = $region39
            $region38: #{custom-call.13} parent=23 // pred_region
              loop: start=0, step=1, limit=1
              $region40: #{custom-call.13} parent=38 // loop_pre_header
                _
              $region41: #{custom-call.13} parent=38 // loop_header
                %s78 = sphi 0, %s82
                %p79 = scmp.ge.s32.totalorder %s78, 1
                %s83 = sphi %s56, %s56
                %s84 = sphi %s51, %s51
              $region42: #{custom-call.13} parent=38 // loop_header_branch
                %81 = sbr.rel (%p79) target = $region46
              $region43: #{custom-call.13} parent=38 // loop_body
                %v85 = vld [vmem:[%s83] sm:$0xf]
                %86 = vst [vmem:[%s84] sm:$0xf] %v85
              $region44: #{custom-call.13} parent=38 // loop_footer
                %s82 = sadd.s32 1, %s78
              $region45: #{custom-call.13} parent=38 // loop_footer_branch
                %77 = sbr.rel target = $region41
              $region46: #{custom-call.13} parent=38 // loop_exit
                _
            $region39: #{custom-call.13} parent=23 // pred_fallthru
              _
          $region24: #{custom-call.13} parent=19 // pred_fallthru
            _
          // Predicated region
          $region25: #{custom-call.13} parent=19 // pred_check
            _
          $region26: #{custom-call.13} parent=19 // pred_check_branch
            %62 = sbr.rel (0) target = $region28
          $region27: #{custom-call.13} parent=19 // pred_region
            loop: start=0, step=1, limit=1
            $region29: #{custom-call.13} parent=27 // loop_pre_header
              _
            $region30: #{custom-call.13} parent=27 // loop_header
              %s65 = sphi 0, %s69
              %p66 = scmp.ge.s32.totalorder %s65, 1
              %s70 = sphi %s56, %s56
              %s71 = sphi %s51, %s51
            $region31: #{custom-call.13} parent=27 // loop_header_branch
              %68 = sbr.rel (%p66) target = $region35
            $region32: #{custom-call.13} parent=27 // loop_body
              %v72 = vld [vmem:[%s70] sm:$0xf]
              %73 = vst [vmem:[%s71] sm:$0xf] %v72
            $region33: #{custom-call.13} parent=27 // loop_footer
              %s69 = sadd.s32 1, %s65
            $region34: #{custom-call.13} parent=27 // loop_footer_branch
              %64 = sbr.rel target = $region30
            $region35: #{custom-call.13} parent=27 // loop_exit
              _
          $region28: #{custom-call.13} parent=19 // pred_fallthru
            _
        $region20: #{custom-call.13} parent=15 // pred_fallthru
          _
        %87 = vnop
      $region16: #{custom-call.13} parent=5 // pred_fallthru
        _
      %p88 = scmp.le.s32.totalorder 1, %s3
      %p89 = scmp.lt.s32.totalorder %s3, 5
      %p90 = pnand %p88, %p89
      %p91 = pneg %p90
      // Predicated region
      $region47: #{custom-call.13} parent=5 // pred_check
        _
      $region48: #{custom-call.13} parent=5 // pred_check_branch
        %93 = sbr.rel (%p90) target = $region50
      $region49: #{custom-call.13} parent=5 // pred_region
        #allocation4 [shape = 'f32[4,4]{1,0}', space=vmem, size = 0x1000, scoped, tag = 'rescaled input a']
        %s94 = ssub.s32 %s3, 1
        %s95 = sand.u32 %s8, 1
        %s96 = sand.u32 %s8, 1
        %s97 = smul.addr %s96, 4
        %s98 = scalar_lea.vmem [#allocation1], %s97
        %s99 = sand.u32 %s8, 1
        %s100 = sand.u32 %s8, 1
        %s101 = smul.addr %s100, 4
        %s102 = scalar_lea.vmem [#allocation1], %s101
        %s103 = sand.u32 %s8, 1
        %s104 = sand.u32 %s8, 1
        %s105 = smul.addr %s104, 4
        %s106 = scalar_lea.vmem [#allocation3], %s105
        %s108 = sshllo.u32 0, 4
        %v109 = vld [vmem:[%s102] sm:%s108]
        %110 = vst [vmem:[#allocation0] sm:%s108] %v109
        %v111 = vlaneseq
        %v112 = vand.u32 %v111, 127
        %vm113 = vcmp.lt.s32.totalorder %v112, 4
        %v114 = vlaneseq
        %v115 = vshrl.u32 %v114, 7
        %vm117 = vcmp.eq.s32.totalorder %v115, %v112
        %v118 = vld [vmem:[#allocation0] sm:$0xff]
        %v119 = vsel %vm117, %v118, 0.0
        %120 = vadd.xlane.f32.xlu0 %v119
        %v121 = vpop.xlane.xlu0 %120
        %vm122 = vcmp.ge.s32.totalorder %v115, %v112
        %vm123 = vmand %vm122, %vm113
        %v124 = vsel %vm123, %v118, 0.0
        %v125 = vrcp.pop %v121
        %v126 = vmul.f32 %v124, %v125
        %127 = vst [vmem:[#allocation4] sm:$0xff] %v126
        %v128 = vlaneseq
        %v129 = vand.u32 %v128, 127
        %v130 = vlaneseq
        %v131 = vshrl.u32 %v130, 7
        %vm133 = vcmp.eq.s32.totalorder %v129, %v131
        %v134 = vlaneseq
        %v135 = vand.u32 %v134, 127
        %vm136 = vcmp.eq.s32.totalorder %v135, 0
        %v137 = vsel %vm136, 1.0, -1.0
        %v138 = vsel %vm133, %v137, 0.0
        %s139 = scalar_lea.vmem [#allocation4], 1
        %v140 = vld [vmem:[%s139] ss:$0 sm:$0xff]
        %v141 = vxor.u32 %v140, 2147483648
        %v142 = vlaneseq
        %v143 = vand.u32 %v142, 127
        %vm144 = vcmp.eq.s32.totalorder %v143, 1
        %v145 = vmul.f32 %v141, %v138
        %146 = vadd.xlane.f32.xlu0 %v145
        %v147 = vpop.xlane.xlu0 %146
        %v148 = vsel %vm144, %v147, %v138
        %s149 = scalar_lea.vmem [#allocation4], 2
        %v150 = vld [vmem:[%s149] ss:$0 sm:$0xff]
        %v151 = vxor.u32 %v150, 2147483648
        %v152 = vlaneseq
        %v153 = vand.u32 %v152, 127
        %vm154 = vcmp.eq.s32.totalorder %v153, 2
        %v155 = vmul.f32 %v151, %v148
        %156 = vadd.xlane.f32.xlu0 %v155
        %v157 = vpop.xlane.xlu0 %156
        %v158 = vsel %vm154, %v157, %v148
        %s159 = scalar_lea.vmem [#allocation4], 3
        %v160 = vld [vmem:[%s159] ss:$0 sm:$0xff]
        %v161 = vxor.u32 %v160, 2147483648
        %v162 = vlaneseq
        %v163 = vand.u32 %v162, 127
        %vm164 = vcmp.eq.s32.totalorder %v163, 3
        %v165 = vmul.f32 %v161, %v158
        %166 = vadd.xlane.f32.xlu0 %v165
        %v167 = vpop.xlane.xlu0 %166
        %v168 = vsel %vm164, %v167, %v158
        %v169 = vrcp.pop %v121
        %v170 = vmul.f32 %v168, %v169
        %vm171 = vweird.f32 %v121
        %v172 = vsel %vm171, %v168, %v170
        %173 = vst [vmem:[#allocation2] sm:$0xff] %v172
        %s175 = sshllo.u32 0, 4
        %v177 = vld [vmem:[#allocation2] sm:%s175]
        %s178 = sshllo.u32 0, 4
        %179 = vst [vmem:[%s106] sm:%s178] %v177
        %s180 = sand.u32 %s8, 1
        %s181 = sand.u32 %s8, 1
        %s182 = smul.addr %s181, 4
        %s183 = scalar_lea.vmem [#allocation3], %s182
        %s184 = sadd.s32 %s17, %s16
        %s185 = sadd.s32 %s184, %s15
        %s186 = sadd.s32 %s185, %s14
        %s187 = smul.addr %s186, 4
        %s188 = scalar_lea.vmem %s1, %s187
        // Predicated region
        $region51: #{custom-call.13} parent=49 // pred_check
          _
        $region52: #{custom-call.13} parent=49 // pred_check_branch
          %190 = sbr.rel (0) target = $region54
        $region53: #{custom-call.13} parent=49 // pred_region
          // Predicated region
          $region55: #{custom-call.13} parent=53 // pred_check
            _
          $region56: #{custom-call.13} parent=53 // pred_check_branch
            %192 = sbr.rel target = $region58
          $region57: #{custom-call.13} parent=53 // pred_region
            // Predicated region
            $region70: #{custom-call.13} parent=57 // pred_check
              _
            $region71: #{custom-call.13} parent=57 // pred_check_branch
              %207 = sbr.rel (0) target = $region73
            $region72: #{custom-call.13} parent=57 // pred_region
              loop: start=0, step=1, limit=1
              $region74: #{custom-call.13} parent=72 // loop_pre_header
                _
              $region75: #{custom-call.13} parent=72 // loop_header
                %s210 = sphi 0, %s214
                %p211 = scmp.ge.s32.totalorder %s210, 1
                %s215 = sphi %s183, %s183
                %s216 = sphi %s188, %s188
              $region76: #{custom-call.13} parent=72 // loop_header_branch
                %213 = sbr.rel (%p211) target = $region80
              $region77: #{custom-call.13} parent=72 // loop_body
                %v217 = vld [vmem:[%s215] sm:$0xf]
                %218 = vst [vmem:[%s216] sm:$0xf] %v217
              $region78: #{custom-call.13} parent=72 // loop_footer
                %s214 = sadd.s32 1, %s210
              $region79: #{custom-call.13} parent=72 // loop_footer_branch
                %209 = sbr.rel target = $region75
              $region80: #{custom-call.13} parent=72 // loop_exit
                _
            $region73: #{custom-call.13} parent=57 // pred_fallthru
              _
          $region58: #{custom-call.13} parent=53 // pred_fallthru
            _
          // Predicated region
          $region59: #{custom-call.13} parent=53 // pred_check
            _
          $region60: #{custom-call.13} parent=53 // pred_check_branch
            %194 = sbr.rel (0) target = $region62
          $region61: #{custom-call.13} parent=53 // pred_region
            loop: start=0, step=1, limit=1
            $region63: #{custom-call.13} parent=61 // loop_pre_header
              _
            $region64: #{custom-call.13} parent=61 // loop_header
              %s197 = sphi 0, %s201
              %p198 = scmp.ge.s32.totalorder %s197, 1
              %s202 = sphi %s183, %s183
              %s203 = sphi %s188, %s188
            $region65: #{custom-call.13} parent=61 // loop_header_branch
              %200 = sbr.rel (%p198) target = $region69
            $region66: #{custom-call.13} parent=61 // loop_body
              %v204 = vld [vmem:[%s202] sm:$0xf]
              %205 = vst [vmem:[%s203] sm:$0xf] %v204
            $region67: #{custom-call.13} parent=61 // loop_footer
              %s201 = sadd.s32 1, %s197
            $region68: #{custom-call.13} parent=61 // loop_footer_branch
              %196 = sbr.rel target = $region64
            $region69: #{custom-call.13} parent=61 // loop_exit
              _
          $region62: #{custom-call.13} parent=53 // pred_fallthru
            _
        $region54: #{custom-call.13} parent=49 // pred_fallthru
          _
        %219 = vnop
      $region50: #{custom-call.13} parent=5 // pred_fallthru
        _
      %p220 = scmp.le.s32.totalorder 2, %s3
      // Predicated region
      $region81: #{custom-call.13} parent=5 // pred_check
        %p221 = pneg %p220
      $region82: #{custom-call.13} parent=5 // pred_check_branch
        %223 = sbr.rel (%p221) target = $region84
      $region83: #{custom-call.13} parent=5 // pred_region
        %s224 = ssub.s32 %s3, 2
        %s225 = sand.u32 %s9, 1
        %s226 = sand.u32 %s9, 1
        %s227 = smul.addr %s226, 4
        %s228 = scalar_lea.vmem [#allocation3], %s227
      $region84: #{custom-call.13} parent=5 // pred_fallthru
        _
    $region6: #{custom-call.13} parent=1 // loop_footer
      %s7 = sadd.s32 1, %s3
    $region7: #{custom-call.13} parent=1 // loop_footer_branch
      %2 = sbr.rel target = $region3
    $region8: #{custom-call.13} parent=1 // loop_exit
      _

// kernel: ray_builder_forward.1
$region0: #{ray_builder_forward.1}
  #allocation0 [shape = 'u32[]', space=smem, size = 0x4, offset = 0x4, fixed_abs, tag = 'smem constant byte address 0x4 - core index']
  #allocation1 [shape = 'u32[144,128]{1,0:T(1,128)}', space=vmem, size = 0x12000, scoped, tag = 'internal scratch']
  %s0 = inlined_call_operand.vmem [shape: f32[64], index: 0, kind: input, shape index: {}]
  %s1 = inlined_call_operand.vmem [shape: f32[2,8,128], index: 1, kind: input, shape index: {}]
  %s2 = inlined_call_operand.vmem [shape: s32[8,128], index: 2, kind: input, shape index: {}]
  %s3 = inlined_call_operand.vmem [shape: f32[8,8,128], index: 3, kind: output, shape index: {}]
  %s4 = sld [smem:[#allocation0]]
  $region26: #{ray_builder_forward.1} parent=0
    _
  %s6 = ssub.s32 1, %s4
  %s7 = scalar_select 0, %s6, %s4
  $region1: #{ray_builder_forward.1} parent=0
    #allocation2 [shape = 'u8[512]{0}', space=smem, size = 0x200, scoped, tag = 'input window, operand 0, single buffered']
    #allocation3 [shape = 's32[1]{0}', space=sflag, size = 0x4, scoped, tag = 'scoped memory for ray_builder_forward.1']
    %8 = vsyncpa [#allocation3], 0
    // Predicated region
    $region2: #{ray_builder_forward.1} parent=1 // pred_check
      _
    $region3: #{ray_builder_forward.1} parent=1 // pred_check_branch
      %10 = sbr.rel (0) target = $region5
    $region4: #{ray_builder_forward.1} parent=1 // pred_region
      %s12 = ssub.s32 16, 16
      %13 = vsyncadd [#allocation3], %s12
      %s15 = sshll.u32 %s0, 4
      %s16 = int_to_ptr.vmem [resolvable:$true] %s15
      %18 = dma.vmem_to_smem %s16, 16, [#allocation2], [#allocation3]
    $region5: #{ray_builder_forward.1} parent=1 // pred_fallthru
      _
    // Predicated region
    $region6: #{ray_builder_forward.1} parent=1 // pred_check
      _
    $region7: #{ray_builder_forward.1} parent=1 // pred_check_branch
      %20 = sbr.rel (0) target = $region9
    $region8: #{ray_builder_forward.1} parent=1 // pred_region
      _
    $region9: #{ray_builder_forward.1} parent=1 // pred_fallthru
      _
    // Predicated region
    $region10: #{ray_builder_forward.1} parent=1 // pred_check
      _
    $region11: #{ray_builder_forward.1} parent=1 // pred_check_branch
      %22 = sbr.rel (0) target = $region13
    $region12: #{ray_builder_forward.1} parent=1 // pred_region
      _
    $region13: #{ray_builder_forward.1} parent=1 // pred_fallthru
      _
    // Predicated region
    $region14: #{ray_builder_forward.1} parent=1 // pred_check
      _
    $region15: #{ray_builder_forward.1} parent=1 // pred_check_branch
      %24 = sbr.rel (0) target = $region17
    $region16: #{ray_builder_forward.1} parent=1 // pred_region
      %25 = dma.done [#allocation3], 16
    $region17: #{ray_builder_forward.1} parent=1 // pred_fallthru
      _
    %26 = sfence
    %v27 = vld [vmem:[%s1] sm:$0xff]
    %s28 = scalar_lea.vmem %s1, 8
    %v29 = vld [vmem:[%s28] sm:$0xff]
    %v30 = vld [vmem:[%s2] sm:$0xff]
    %vm31 = vcmp.eq.s32.totalorder %v30, 1
    %vm32 = vcmp.eq.s32.totalorder %v30, 2
    %vm33 = vcmp.eq.s32.totalorder %v30, 3
    %s34 = sld [smem:[#allocation2]]
    %v35 = vstv %s34
    %s36 = sld [smem:[#allocation2 + $0x10]]
    %v37 = vstv %s36
    %v38 = vsel %vm31, %v37, %v35
    %s39 = sld [smem:[#allocation2 + $0x20]]
    %v40 = vstv %s39
    %v41 = vsel %vm32, %v40, %v38
    %s42 = sld [smem:[#allocation2 + $0x30]]
    %v43 = vstv %s42
    %v44 = vsel %vm33, %v43, %v41
    %s45 = sld [smem:[#allocation2 + $0x1]]
    %v46 = vstv %s45
    %s47 = sld [smem:[#allocation2 + $0x11]]
    %v48 = vstv %s47
    %v49 = vsel %vm31, %v48, %v46
    %s50 = sld [smem:[#allocation2 + $0x21]]
    %v51 = vstv %s50
    %v52 = vsel %vm32, %v51, %v49
    %s53 = sld [smem:[#allocation2 + $0x31]]
    %v54 = vstv %s53
    %v55 = vsel %vm33, %v54, %v52
    %s56 = sld [smem:[#allocation2 + $0x2]]
    %v57 = vstv %s56
    %s58 = sld [smem:[#allocation2 + $0x12]]
    %v59 = vstv %s58
    %v60 = vsel %vm31, %v59, %v57
    %s61 = sld [smem:[#allocation2 + $0x22]]
    %v62 = vstv %s61
    %v63 = vsel %vm32, %v62, %v60
    %s64 = sld [smem:[#allocation2 + $0x32]]
    %v65 = vstv %s64
    %v66 = vsel %vm33, %v65, %v63
    %s67 = sld [smem:[#allocation2 + $0x3]]
    %v68 = vstv %s67
    %s69 = sld [smem:[#allocation2 + $0x13]]
    %v70 = vstv %s69
    %v71 = vsel %vm31, %v70, %v68
    %s72 = sld [smem:[#allocation2 + $0x23]]
    %v73 = vstv %s72
    %v74 = vsel %vm32, %v73, %v71
    %s75 = sld [smem:[#allocation2 + $0x33]]
    %v76 = vstv %s75
    %v77 = vsel %vm33, %v76, %v74
    %v78 = vmul.f32 %v44, %v27
    %v79 = vmul.f32 %v55, %v29
    %v80 = vadd.f32 %v78, %v79
    %v81 = vadd.f32 %v80, %v77
    %v82 = vsub.f32 %v81, %v66
    %v83 = vadd.f32 %v81, %v66
    %s84 = sld [smem:[#allocation2 + $0x4]]
    %v85 = vstv %s84
    %s86 = sld [smem:[#allocation2 + $0x14]]
    %v87 = vstv %s86
    %v88 = vsel %vm31, %v87, %v85
    %s89 = sld [smem:[#allocation2 + $0x24]]
    %v90 = vstv %s89
    %v91 = vsel %vm32, %v90, %v88
    %s92 = sld [smem:[#allocation2 + $0x34]]
    %v93 = vstv %s92
    %v94 = vsel %vm33, %v93, %v91
    %s95 = sld [smem:[#allocation2 + $0x5]]
    %v96 = vstv %s95
    %s97 = sld [smem:[#allocation2 + $0x15]]
    %v98 = vstv %s97
    %v99 = vsel %vm31, %v98, %v96
    %s100 = sld [smem:[#allocation2 + $0x25]]
    %v101 = vstv %s100
    %v102 = vsel %vm32, %v101, %v99
    %s103 = sld [smem:[#allocation2 + $0x35]]
    %v104 = vstv %s103
    %v105 = vsel %vm33, %v104, %v102
    %s106 = sld [smem:[#allocation2 + $0x6]]
    %v107 = vstv %s106
    %s108 = sld [smem:[#allocation2 + $0x16]]
    %v109 = vstv %s108
    %v110 = vsel %vm31, %v109, %v107
    %s111 = sld [smem:[#allocation2 + $0x26]]
    %v112 = vstv %s111
    %v113 = vsel %vm32, %v112, %v110
    %s114 = sld [smem:[#allocation2 + $0x36]]
    %v115 = vstv %s114
    %v116 = vsel %vm33, %v115, %v113
    %s117 = sld [smem:[#allocation2 + $0x7]]
    %v118 = vstv %s117
    %s119 = sld [smem:[#allocation2 + $0x17]]
    %v120 = vstv %s119
    %v121 = vsel %vm31, %v120, %v118
    %s122 = sld [smem:[#allocation2 + $0x27]]
    %v123 = vstv %s122
    %v124 = vsel %vm32, %v123, %v121
    %s125 = sld [smem:[#allocation2 + $0x37]]
    %v126 = vstv %s125
    %v127 = vsel %vm33, %v126, %v124
    %v128 = vmul.f32 %v94, %v27
    %v129 = vmul.f32 %v105, %v29
    %v130 = vadd.f32 %v128, %v129
    %v131 = vadd.f32 %v130, %v127
    %v132 = vsub.f32 %v131, %v116
    %v133 = vadd.f32 %v131, %v116
    %s134 = sld [smem:[#allocation2 + $0x8]]
    %v135 = vstv %s134
    %s136 = sld [smem:[#allocation2 + $0x18]]
    %v137 = vstv %s136
    %v138 = vsel %vm31, %v137, %v135
    %s139 = sld [smem:[#allocation2 + $0x28]]
    %v140 = vstv %s139
    %v141 = vsel %vm32, %v140, %v138
    %s142 = sld [smem:[#allocation2 + $0x38]]
    %v143 = vstv %s142
    %v144 = vsel %vm33, %v143, %v141
    %s145 = sld [smem:[#allocation2 + $0x9]]
    %v146 = vstv %s145
    %s147 = sld [smem:[#allocation2 + $0x19]]
    %v148 = vstv %s147
    %v149 = vsel %vm31, %v148, %v146
    %s150 = sld [smem:[#allocation2 + $0x29]]
    %v151 = vstv %s150
    %v152 = vsel %vm32, %v151, %v149
    %s153 = sld [smem:[#allocation2 + $0x39]]
    %v154 = vstv %s153
    %v155 = vsel %vm33, %v154, %v152
    %s156 = sld [smem:[#allocation2 + $0xa]]
    %v157 = vstv %s156
    %s158 = sld [smem:[#allocation2 + $0x1a]]
    %v159 = vstv %s158
    %v160 = vsel %vm31, %v159, %v157
    %s161 = sld [smem:[#allocation2 + $0x2a]]
    %v162 = vstv %s161
    %v163 = vsel %vm32, %v162, %v160
    %s164 = sld [smem:[#allocation2 + $0x3a]]
    %v165 = vstv %s164
    %v166 = vsel %vm33, %v165, %v163
    %s167 = sld [smem:[#allocation2 + $0xb]]
    %v168 = vstv %s167
    %s169 = sld [smem:[#allocation2 + $0x1b]]
    %v170 = vstv %s169
    %v171 = vsel %vm31, %v170, %v168
    %s172 = sld [smem:[#allocation2 + $0x2b]]
    %v173 = vstv %s172
    %v174 = vsel %vm32, %v173, %v171
    %s175 = sld [smem:[#allocation2 + $0x3b]]
    %v176 = vstv %s175
    %v177 = vsel %vm33, %v176, %v174
    %v178 = vmul.f32 %v144, %v27
    %v179 = vmul.f32 %v155, %v29
    %v180 = vadd.f32 %v178, %v179
    %v181 = vadd.f32 %v180, %v177
    %v182 = vsub.f32 %v181, %v166
    %v183 = vadd.f32 %v181, %v166
    %s184 = sld [smem:[#allocation2 + $0xc]]
    %v185 = vstv %s184
    %s186 = sld [smem:[#allocation2 + $0x1c]]
    %v187 = vstv %s186
    %v188 = vsel %vm31, %v187, %v185
    %s189 = sld [smem:[#allocation2 + $0x2c]]
    %v190 = vstv %s189
    %v191 = vsel %vm32, %v190, %v188
    %s192 = sld [smem:[#allocation2 + $0x3c]]
    %v193 = vstv %s192
    %v194 = vsel %vm33, %v193, %v191
    %s195 = sld [smem:[#allocation2 + $0xd]]
    %v196 = vstv %s195
    %s197 = sld [smem:[#allocation2 + $0x1d]]
    %v198 = vstv %s197
    %v199 = vsel %vm31, %v198, %v196
    %s200 = sld [smem:[#allocation2 + $0x2d]]
    %v201 = vstv %s200
    %v202 = vsel %vm32, %v201, %v199
    %s203 = sld [smem:[#allocation2 + $0x3d]]
    %v204 = vstv %s203
    %v205 = vsel %vm33, %v204, %v202
    %s206 = sld [smem:[#allocation2 + $0xe]]
    %v207 = vstv %s206
    %s208 = sld [smem:[#allocation2 + $0x1e]]
    %v209 = vstv %s208
    %v210 = vsel %vm31, %v209, %v207
    %s211 = sld [smem:[#allocation2 + $0x2e]]
    %v212 = vstv %s211
    %v213 = vsel %vm32, %v212, %v210
    %s214 = sld [smem:[#allocation2 + $0x3e]]
    %v215 = vstv %s214
    %v216 = vsel %vm33, %v215, %v213
    %s217 = sld [smem:[#allocation2 + $0xf]]
    %v218 = vstv %s217
    %s219 = sld [smem:[#allocation2 + $0x1f]]
    %v220 = vstv %s219
    %v221 = vsel %vm31, %v220, %v218
    %s222 = sld [smem:[#allocation2 + $0x2f]]
    %v223 = vstv %s222
    %v224 = vsel %vm32, %v223, %v221
    %s225 = sld [smem:[#allocation2 + $0x3f]]
    %v226 = vstv %s225
    %v227 = vsel %vm33, %v226, %v224
    %v228 = vmul.f32 %v194, %v27
    %v229 = vmul.f32 %v205, %v29
    %v230 = vadd.f32 %v228, %v229
    %v231 = vadd.f32 %v230, %v227
    %v232 = vsub.f32 %v231, %v216
    %v233 = vadd.f32 %v231, %v216
    %v234 = vrcp.pop %v232
    %v235 = vmul.f32 %v232, %v234
    %v236 = vsub.f32 2.0, %v235
    %v237 = vmul.f32 %v234, %v236
    %v238 = vrcp.pop %v233
    %v239 = vmul.f32 %v233, %v238
    %v240 = vsub.f32 2.0, %v239
    %v241 = vmul.f32 %v238, %v240
    %v242 = vmul.f32 %v82, %v237
    %v243 = vmul.f32 %v132, %v237
    %v244 = vmul.f32 %v182, %v237
    %v245 = vmul.f32 %v83, %v241
    %v246 = vmul.f32 %v133, %v241
    %v247 = vmul.f32 %v183, %v241
    %v248 = vsub.f32 %v245, %v242
    %v249 = vsub.f32 %v246, %v243
    %v250 = vsub.f32 %v247, %v244
    %v251 = vmul.f32 %v248, %v248
    %v252 = vmul.f32 %v249, %v249
    %v253 = vadd.f32 %v251, %v252
    %v254 = vmul.f32 %v250, %v250
    %v255 = vadd.f32 %v253, %v254
    %v256 = vadd.f32 %v255, 1e-12
    %v257 = vrsqrt.pop %v256
    %v258 = vmul.f32 %v248, %v257
    %v259 = vmul.f32 %v249, %v257
    %v260 = vmul.f32 %v250, %v257
    %v261 = vmul.f32 %v242, %v258
    %v262 = vmul.f32 %v243, %v259
    %v263 = vadd.f32 %v261, %v262
    %v264 = vmul.f32 %v244, %v260
    %v265 = vadd.f32 %v263, %v264
    %v266 = vmul.f32 %v265, 2.0
    %v267 = vmul.f32 %v242, %v242
    %v268 = vmul.f32 %v243, %v243
    %v269 = vadd.f32 %v267, %v268
    %v270 = vmul.f32 %v244, %v244
    %v271 = vadd.f32 %v269, %v270
    %v272 = vsub.f32 %v271, 1.0
    %v273 = vmul.f32 %v266, %v266
    %v274 = vmul.f32 %v272, 4.0
    %v275 = vsub.f32 %v273, %v274
    %vm276 = vcmp.ge.f32.partialorder %v275, 0.0
    %v277 = vmax.f32 %v275, 0.0
    %v278 = vrsqrt.pop %v277
    %v279 = vmul.f32 %v277, %v278
    %vm280 = vcmp.eq.f32.partialorder %v277, inf
    %v281 = vsel %vm280, %v277, %v279
    %vm282 = vcmp.eq.f32.partialorder %v277, 0.0
    %v283 = vand.u32 %v277, 2147483648
    %v284 = vsel %vm282, %v283, %v281
    %v285 = vsub.f32 0.0, %v266
    %v286 = vsub.f32 %v285, %v284
    %v287 = vmul.f32 %v286, 0.5
    %v288 = vmax.f32 %v287, 0.0
    %v289 = vsel %vm276, %v288, 0.0
    %v290 = vadd.f32 %v285, %v284
    %v291 = vmul.f32 %v290, 0.5
    %v292 = vsel %vm276, %v291, 0.0
    %293 = vst [vmem:[%s3] sm:$0xff] %v242
    %s294 = scalar_lea.vmem %s3, 8
    %295 = vst [vmem:[%s294] sm:$0xff] %v243
    %s296 = scalar_lea.vmem %s3, 16
    %297 = vst [vmem:[%s296] sm:$0xff] %v244
    %s298 = scalar_lea.vmem %s3, 24
    %299 = vst [vmem:[%s298] sm:$0xff] %v258
    %s300 = scalar_lea.vmem %s3, 32
    %301 = vst [vmem:[%s300] sm:$0xff] %v259
    %s302 = scalar_lea.vmem %s3, 40
    %303 = vst [vmem:[%s302] sm:$0xff] %v260
    %s304 = scalar_lea.vmem %s3, 48
    %305 = vst [vmem:[%s304] sm:$0xff] %v289
    %s306 = scalar_lea.vmem %s3, 56
    %307 = vst [vmem:[%s306] sm:$0xff] %v292
    // Predicated region
    $region18: #{ray_builder_forward.1} parent=1 // pred_check
      _
    $region19: #{ray_builder_forward.1} parent=1 // pred_check_branch
      %309 = sbr.rel (0) target = $region21
    $region20: #{ray_builder_forward.1} parent=1 // pred_region
      _
    $region21: #{ray_builder_forward.1} parent=1 // pred_fallthru
      _
    // Predicated region
    $region22: #{ray_builder_forward.1} parent=1 // pred_check
      _
    $region23: #{ray_builder_forward.1} parent=1 // pred_check_branch
      %311 = sbr.rel (0) target = $region25
    $region24: #{ray_builder_forward.1} parent=1 // pred_region
      _
    $region25: #{ray_builder_forward.1} parent=1 // pred_fallthru
      _
    %312 = vsyncpa [#allocation3], 1

</llo_original>
